<compile_context>
chip_gen: v6e
topology: v6e:2x2x1
jax: 0.10.0
libtpu: 0.0.40
codegen_flags: <defaults>
</compile_context>

<pallas_src>
import jax
import jax.numpy as jnp
from jax.experimental import pallas as pl
from jax.experimental.pallas import tpu as pltpu

EMBED_DIM = 32
H1 = 512
H2 = 256
H1_CHUNK = 256        # chunk the H1 contraction; full f32 h1 is never materialized
MAX_BATCH_TILE = 2048  # max batch rows per grid step (batch lives on lanes in-kernel)
LANE_MULTIPLE = 256    # keep tiles lane-dense (multiple of 128; 256 for headroom)


def _pick_batch_tile(B):
    """Largest lane-dense tile <= MAX_BATCH_TILE; shrunk so batches that allow it get
    >= 2 grid steps (the 'parallel' axis then shards across both v7x TensorCores)."""
    padded = pl.cdiv(max(B, 1), LANE_MULTIPLE) * LANE_MULTIPLE
    tile = min(MAX_BATCH_TILE, padded)
    if tile > LANE_MULTIPLE and pl.cdiv(B, tile) < 2:
        tile = max(LANE_MULTIPLE, pl.cdiv(pl.cdiv(B, 2), LANE_MULTIPLE) * LANE_MULTIPLE)
    return tile


def reward_mlp_kernel(x_ref, w1_ref, b1_ref, w2_ref, b2_ref, w3_ref, b3_ref, o_ref):
    # x_ref : (TILE, E)   f32/bf16  -- streamed batch tile
    # w1_ref: (H1, E)     bf16      -- PyTorch (out, in) layout
    # b1_ref: (H1, 1)     f32
    # w2_ref: (H2, H1)    bf16
    # b2_ref: (H2, 1)     f32
    # w3_ref: (H2, 1)     f32       -- layer-3 weight as a column
    # b3_ref: (1, 1)      f32
    # o_ref : (1, TILE)   f32       -- lane-dense reward row
    tile = x_ref.shape[0]
    x = x_ref[...].astype(jnp.bfloat16)  # no-op if the producer already emits bf16

    # Layers 1+2 fused over H1 chunks: h2[o, b] accumulated in f32; the (H1_CHUNK, TILE)
    # intermediate stays small instead of a full (H1, TILE) f32 VMEM round-trip.
    h2 = jnp.zeros((H2, tile), jnp.float32)
    for c in range(H1 // H1_CHUNK):
        lo = c * H1_CHUNK
        hi = lo + H1_CHUNK
        # h1_c[o, b] = sum_e W1[lo+o, e] * x[b, e]  -> (H1_CHUNK, TILE), batch on lanes.
        h1_c = jax.lax.dot_general(
            w1_ref[lo:hi, :], x,
            dimension_numbers=(((1,), (1,)), ((), ())),
            preferred_element_type=jnp.float32,
        )
        h1_c = jnp.maximum(h1_c + b1_ref[lo:hi, :], 0.0)  # bias + ReLU (Dropout = id)
        # (H2, H1_CHUNK) @ (H1_CHUNK, TILE) -> (H2, TILE), f32 accumulation.
        h2 = h2 + jnp.dot(w2_ref[:, lo:hi], h1_c.astype(jnp.bfloat16),
                          preferred_element_type=jnp.float32)

    h2 = jnp.maximum(h2 + b2_ref[...], 0.0)  # bias + ReLU (Dropout = id)

    # Layer 3 (256 -> 1): elementwise multiply + sublane reduction (VPU/XLU, off the MXU).
    out = jnp.sum(h2 * w3_ref[...], axis=0, keepdims=True) + b3_ref[...]
    o_ref[...] = out.astype(o_ref.dtype)


@jax.jit
def reward_model_forward(x, w1, b1, w2, b2, w3, b3):
    B, E = x.shape
    tile = _pick_batch_tile(B)
    num_tiles = pl.cdiv(B, tile)
    Bp = num_tiles * tile

    # Weights are stored persistently in bf16 (see init_params); these are no-ops then.
    if w1.dtype != jnp.bfloat16:
        w1 = w1.astype(jnp.bfloat16)
    if w2.dtype != jnp.bfloat16:
        w2 = w2.astype(jnp.bfloat16)

    def const_spec(shape):
        # Constant-index blocks: fetched once, single-buffered (default double-buffering
        # would just waste VMEM on blocks whose index_map is always (0, 0)).
        return pl.BlockSpec(shape, lambda i: (0, 0), pipeline_mode=pl.Buffered(1))

    out_row = pl.pallas_call(
        reward_mlp_kernel,
        out_shape=jax.ShapeDtypeStruct((1, Bp), jnp.float32),
        grid_spec=pltpu.PrefetchScalarGridSpec(
            num_scalar_prefetch=0,
            grid=(num_tiles,),
            in_specs=[
                pl.BlockSpec((tile, E), lambda i: (i, 0)),  # x tile (the only stream)
                const_spec((H1, E)),                        # W1 (bf16)
                const_spec((H1, 1)),                        # b1
                const_spec((H2, H1)),                       # W2 (bf16)
                const_spec((H2, 1)),                        # b2
                const_spec((H2, 1)),                        # w3 (column)
                const_spec((1, 1)),                         # b3
            ],
            out_specs=pl.BlockSpec((1, tile), lambda i: (0, i)),
        ),
        compiler_params=pltpu.CompilerParams(
            dimension_semantics=("parallel",),  # shards across TCs on v7x when grid >= 2
        ),
    )(x, w1, b1, w2, b2, w3, b3)

    # Lane-dense (1, Bp) row -> (B, 1) column; ragged-tile garbage lanes are dropped.
    return out_row[0, :B].reshape(B, 1)


def init_params(key, embedding_dim):
    """Deterministic init mimicking nn.Linear default (uniform +/- 1/sqrt(fan_in)).

    Layouts chosen for the kernel: W1/W2 in PyTorch (out, in) layout stored as bf16
    (persistent MXU dtype); biases as (out, 1) f32 columns; w3 as an (H2, 1) f32 column.
    """
    keys = jax.random.split(key, 6)

    def linear(kw, kb, fan_in, fan_out):
        bound = 1.0 / float(fan_in) ** 0.5
        w = jax.random.uniform(kw, (fan_out, fan_in), jnp.float32, -bound, bound)
        b = jax.random.uniform(kb, (fan_out, 1), jnp.float32, -bound, bound)
        return w, b

    w1, b1 = linear(keys[0], keys[1], embedding_dim, H1)
    w2, b2 = linear(keys[2], keys[3], H1, H2)
    w3, b3 = linear(keys[4], keys[5], H2, 1)     # w3: (1, H2) PyTorch layout
    return (w1.astype(jnp.bfloat16), b1,
            w2.astype(jnp.bfloat16), b2,
            w3.T,                                 # -> (H2, 1) column for the kernel
            b3)


def reference_forward(x, w1, b1, w2, b2, w3, b3):
    """Pure-JAX reference with the same bf16-input / f32-accumulate matmuls.

    Shapes: w1 (H1, E) bf16, b1 (H1, 1), w2 (H2, H1) bf16, b2 (H2, 1),
            w3 (H2, 1) f32, b3 (1, 1).
    """
    h1 = jnp.dot(x.astype(jnp.bfloat16), w1.T,
                 preferred_element_type=jnp.float32) + b1.T
    h1 = jnp.maximum(h1, 0.0)
    h2 = jnp.dot(h1.astype(jnp.bfloat16), w2.T,
                 preferred_element_type=jnp.float32) + b2.T
    h2 = jnp.maximum(h2, 0.0)
    return jnp.sum(h2 * w3.T, axis=-1, keepdims=True) + b3


if __name__ == "__main__":
    key = jax.random.PRNGKey(0)
    k_x, k_p = jax.random.split(key)

    batch = 2
    x = jax.random.normal(k_x, (batch, EMBED_DIM), dtype=jnp.float32)
    params = init_params(k_p, EMBED_DIM)

    out = jax.block_until_ready(reward_model_forward(x, *params))
    ref = jax.block_until_ready(reference_forward(x, *params))

    assert out.shape == (batch, 1), out.shape
    assert jnp.allclose(out, ref, atol=5e-3, rtol=5e-3), (out, ref)

    print("KERNEL_OK")
</pallas_src>

<mosaic_0001>
module attributes {stable_mosaic.version = 11 : i64} {
  func.func @reward_mlp_kernel(%arg0: i32, %arg1: memref<256x32xf32, #tpu.memory_space<vmem>>, %arg2: memref<512x32xbf16, #tpu.memory_space<vmem>>, %arg3: memref<512x1xf32, #tpu.memory_space<vmem>>, %arg4: memref<256x512xbf16, #tpu.memory_space<vmem>>, %arg5: memref<256x1xf32, #tpu.memory_space<vmem>>, %arg6: memref<256x1xf32, #tpu.memory_space<vmem>>, %arg7: memref<1x1xf32, #tpu.memory_space<vmem>>, %arg8: memref<1x256xf32, #tpu.memory_space<vmem>>) attributes {dimension_semantics = [#tpu.dimension_semantics<parallel>], iteration_bounds = array<i64: 1>, scalar_prefetch = 0 : i64, scratch_operands = 0 : i64, tpu.core_type = #tpu.core_type<tc>, window_params = [{transform_indices = @transform_0, window_bounds = array<i64: 256, 32>}, {pipeline_mode = #tpu.pipeline_mode<synchronous>, transform_indices = @transform_1, window_bounds = array<i64: 512, 32>}, {pipeline_mode = #tpu.pipeline_mode<synchronous>, transform_indices = @transform_2, window_bounds = array<i64: 512, 1>}, {pipeline_mode = #tpu.pipeline_mode<synchronous>, transform_indices = @transform_3, window_bounds = array<i64: 256, 512>}, {pipeline_mode = #tpu.pipeline_mode<synchronous>, transform_indices = @transform_4, window_bounds = array<i64: 256, 1>}, {pipeline_mode = #tpu.pipeline_mode<synchronous>, transform_indices = @transform_5, window_bounds = array<i64: 256, 1>}, {pipeline_mode = #tpu.pipeline_mode<synchronous>, transform_indices = @transform_6, window_bounds = array<i64: 1, 1>}, {transform_indices = @transform_7, window_bounds = array<i64: 1, 256>}]} {
    %c0 = arith.constant 0 : index
    %c0_0 = arith.constant 0 : index
    %0 = vector.load %arg1[%c0, %c0_0] : memref<256x32xf32, #tpu.memory_space<vmem>>, vector<256x32xf32>
    %1 = arith.truncf %0 : vector<256x32xf32> to vector<256x32xbf16>
    %cst = arith.constant 0.000000e+00 : f32
    %2 = vector.broadcast %cst : f32 to vector<256x256xf32>
    %c0_1 = arith.constant 0 : index
    %c0_2 = arith.constant 0 : index
    %3 = vector.load %arg2[%c0_1, %c0_2] : memref<512x32xbf16, #tpu.memory_space<vmem>>, vector<256x32xbf16>
    %cst_3 = arith.constant dense<0.000000e+00> : vector<256x256xf32>
    %4 = tpu.matmul %3, %1, %cst_3 {dimension_numbers = #tpu.dot_dimension_numbers<[1], [1], [0], [0], [0, 0, 1, 0], [], []>} : vector<256x32xbf16>, vector<256x32xbf16>, vector<256x256xf32> -> vector<256x256xf32>
    %c0_4 = arith.constant 0 : index
    %c0_5 = arith.constant 0 : index
    %5 = vector.load %arg3[%c0_4, %c0_5] : memref<512x1xf32, #tpu.memory_space<vmem>>, vector<256x1xf32>
    %6 = vector.broadcast %5 : vector<256x1xf32> to vector<256x256xf32>
    %7 = arith.addf %4, %6 : vector<256x256xf32>
    %cst_6 = arith.constant 0.000000e+00 : f32
    %8 = vector.broadcast %cst_6 : f32 to vector<256x256xf32>
    %9 = arith.maximumf %7, %8 : vector<256x256xf32>
    %c0_7 = arith.constant 0 : index
    %c0_8 = arith.constant 0 : index
    %10 = vector.load %arg4[%c0_7, %c0_8] : memref<256x512xbf16, #tpu.memory_space<vmem>>, vector<256x256xbf16>
    %11 = arith.truncf %9 : vector<256x256xf32> to vector<256x256xbf16>
    %cst_9 = arith.constant dense<0.000000e+00> : vector<256x256xf32>
    %12 = tpu.matmul %10, %11, %cst_9 {dimension_numbers = #tpu.dot_dimension_numbers<[1], [0], [0], [1], [0, 0, 1, 1], [], []>} : vector<256x256xbf16>, vector<256x256xbf16>, vector<256x256xf32> -> vector<256x256xf32>
    %13 = arith.addf %2, %12 : vector<256x256xf32>
    %c256 = arith.constant 256 : index
    %c0_10 = arith.constant 0 : index
    %14 = vector.load %arg2[%c256, %c0_10] : memref<512x32xbf16, #tpu.memory_space<vmem>>, vector<256x32xbf16>
    %cst_11 = arith.constant dense<0.000000e+00> : vector<256x256xf32>
    %15 = tpu.matmul %14, %1, %cst_11 {dimension_numbers = #tpu.dot_dimension_numbers<[1], [1], [0], [0], [0, 0, 1, 0], [], []>} : vector<256x32xbf16>, vector<256x32xbf16>, vector<256x256xf32> -> vector<256x256xf32>
    %c256_12 = arith.constant 256 : index
    %c0_13 = arith.constant 0 : index
    %16 = vector.load %arg3[%c256_12, %c0_13] : memref<512x1xf32, #tpu.memory_space<vmem>>, vector<256x1xf32>
    %17 = vector.broadcast %16 : vector<256x1xf32> to vector<256x256xf32>
    %18 = arith.addf %15, %17 : vector<256x256xf32>
    %cst_14 = arith.constant 0.000000e+00 : f32
    %19 = vector.broadcast %cst_14 : f32 to vector<256x256xf32>
    %20 = arith.maximumf %18, %19 : vector<256x256xf32>
    %c0_15 = arith.constant 0 : index
    %c256_16 = arith.constant 256 : index
    %21 = vector.load %arg4[%c0_15, %c256_16] : memref<256x512xbf16, #tpu.memory_space<vmem>>, vector<256x256xbf16>
    %22 = arith.truncf %20 : vector<256x256xf32> to vector<256x256xbf16>
    %cst_17 = arith.constant dense<0.000000e+00> : vector<256x256xf32>
    %23 = tpu.matmul %21, %22, %cst_17 {dimension_numbers = #tpu.dot_dimension_numbers<[1], [0], [0], [1], [0, 0, 1, 1], [], []>} : vector<256x256xbf16>, vector<256x256xbf16>, vector<256x256xf32> -> vector<256x256xf32>
    %24 = arith.addf %13, %23 : vector<256x256xf32>
    %c0_18 = arith.constant 0 : index
    %c0_19 = arith.constant 0 : index
    %25 = vector.load %arg5[%c0_18, %c0_19] : memref<256x1xf32, #tpu.memory_space<vmem>>, vector<256x1xf32>
    %26 = vector.broadcast %25 : vector<256x1xf32> to vector<256x256xf32>
    %27 = arith.addf %24, %26 : vector<256x256xf32>
    %cst_20 = arith.constant 0.000000e+00 : f32
    %28 = vector.broadcast %cst_20 : f32 to vector<256x256xf32>
    %29 = arith.maximumf %27, %28 : vector<256x256xf32>
    %c0_21 = arith.constant 0 : index
    %c0_22 = arith.constant 0 : index
    %30 = vector.load %arg6[%c0_21, %c0_22] : memref<256x1xf32, #tpu.memory_space<vmem>>, vector<256x1xf32>
    %31 = vector.broadcast %30 : vector<256x1xf32> to vector<256x256xf32>
    %32 = arith.mulf %29, %31 : vector<256x256xf32>
    %cst_23 = arith.constant dense<0.000000e+00> : vector<256xf32>
    %33 = vector.multi_reduction <add>, %32, %cst_23 [0] : vector<256x256xf32> to vector<256xf32>
    %34 = vector.shape_cast %33 : vector<256xf32> to vector<1x256xf32>
    %c0_24 = arith.constant 0 : index
    %c0_25 = arith.constant 0 : index
    %35 = vector.load %arg7[%c0_24, %c0_25] : memref<1x1xf32, #tpu.memory_space<vmem>>, vector<1x1xf32>
    %36 = vector.broadcast %35 : vector<1x1xf32> to vector<1x256xf32>
    %37 = arith.addf %34, %36 : vector<1x256xf32>
    %c0_26 = arith.constant 0 : index
    %c0_27 = arith.constant 0 : index
    %38 = vector.load %arg8[%c0_26, %c0_27] : memref<1x256xf32, #tpu.memory_space<vmem>>, vector<1x256xf32>
    tpu.vector_store %arg8[%c0_26, %c0_27], %37 {strides = array<i32>} : memref<1x256xf32, #tpu.memory_space<vmem>>, vector<1x256xf32>,
    return
  }
  func.func @transform_0(%arg0: i32) -> (i32, i32) {
    %c0_i32 = arith.constant 0 : i32
    %c0_i32_0 = arith.constant 0 : i32
    return %arg0, %c0_i32 : i32, i32
  }
  func.func @transform_1(%arg0: i32) -> (i32, i32) {
    %c0_i32 = arith.constant 0 : i32
    %c0_i32_0 = arith.constant 0 : i32
    %c0_i32_1 = arith.constant 0 : i32
    return %c0_i32, %c0_i32_0 : i32, i32
  }
  func.func @transform_2(%arg0: i32) -> (i32, i32) {
    %c0_i32 = arith.constant 0 : i32
    %c0_i32_0 = arith.constant 0 : i32
    %c0_i32_1 = arith.constant 0 : i32
    return %c0_i32, %c0_i32_0 : i32, i32
  }
  func.func @transform_3(%arg0: i32) -> (i32, i32) {
    %c0_i32 = arith.constant 0 : i32
    %c0_i32_0 = arith.constant 0 : i32
    %c0_i32_1 = arith.constant 0 : i32
    return %c0_i32, %c0_i32_0 : i32, i32
  }
  func.func @transform_4(%arg0: i32) -> (i32, i32) {
    %c0_i32 = arith.constant 0 : i32
    %c0_i32_0 = arith.constant 0 : i32
    %c0_i32_1 = arith.constant 0 : i32
    return %c0_i32, %c0_i32_0 : i32, i32
  }
  func.func @transform_5(%arg0: i32) -> (i32, i32) {
    %c0_i32 = arith.constant 0 : i32
    %c0_i32_0 = arith.constant 0 : i32
    %c0_i32_1 = arith.constant 0 : i32
    return %c0_i32, %c0_i32_0 : i32, i32
  }
  func.func @transform_6(%arg0: i32) -> (i32, i32) {
    %c0_i32 = arith.constant 0 : i32
    %c0_i32_0 = arith.constant 0 : i32
    %c0_i32_1 = arith.constant 0 : i32
    return %c0_i32, %c0_i32_0 : i32, i32
  }
  func.func @transform_7(%arg0: i32) -> (i32, i32) {
    %c0_i32 = arith.constant 0 : i32
    %c0_i32_0 = arith.constant 0 : i32
    return %c0_i32, %arg0 : i32, i32
  }
}

</mosaic_0001>

<llo_original>
// kernel: reward_model_forward.1
$region0: #{reward_model_forward.1}
  #allocation0 [shape = 'u32[]', space=smem, size = 0x4, offset = 0x4, fixed_abs, tag = 'smem constant byte address 0x4 - core index']
  #allocation1 [shape = 'u32[144,128]{1,0:T(1,128)}', space=vmem, size = 0x12000, scoped, tag = 'internal scratch']
  #allocation2 [shape = 'f32[1,1]{1,0:T(1,128)S(1)}', space=vmem, size = 0x200, scoped, tag = 'scoped memory for reward_model_forward.1']
  %s0 = inlined_call_operand.vmem [shape: f32[2,32], index: 0, kind: input, shape index: {}]
  %s1 = inlined_call_operand.vmem [shape: bf16[512,32], index: 1, kind: input, shape index: {}]
  %s2 = inlined_call_operand.vmem [shape: f32[512,1], index: 2, kind: input, shape index: {}]
  %s3 = inlined_call_operand.vmem [shape: bf16[256,512], index: 3, kind: input, shape index: {}]
  %s4 = inlined_call_operand.vmem [shape: f32[256,1], index: 4, kind: input, shape index: {}]
  %s5 = inlined_call_operand.vmem [shape: f32[256,1], index: 5, kind: input, shape index: {}]
  %s6 = inlined_call_operand.<no memory space> [shape: f32[1,1], index: 6, kind: input, shape index: {}]
  %s7 = inlined_call_operand.vmem [shape: f32[1,256], index: 7, kind: output, shape index: {}]
  %s8 = sld [smem:[#allocation0]]
  $region38: #{reward_model_forward.1} parent=0
    _
  %s10 = ssub.s32 1, %s8
  %s11 = scalar_select 0, %s10, %s8
  %v12 = vstv %s6
  %13 = vst [vmem:[#allocation2] sm:$0x1] %v12
  // Predicated region
  $region2: #{reward_model_forward.1} parent=0 // pred_check
    _
  $region3: #{reward_model_forward.1} parent=0 // pred_check_branch
    %15 = sbr.rel (0) target = $region5
  $region4: #{reward_model_forward.1} parent=0 // pred_region
    _
  $region5: #{reward_model_forward.1} parent=0 // pred_fallthru
    _
  // Predicated region
  $region6: #{reward_model_forward.1} parent=0 // pred_check
    _
  $region7: #{reward_model_forward.1} parent=0 // pred_check_branch
    %17 = sbr.rel (0) target = $region9
  $region8: #{reward_model_forward.1} parent=0 // pred_region
    _
  $region9: #{reward_model_forward.1} parent=0 // pred_fallthru
    _
  // Predicated region
  $region10: #{reward_model_forward.1} parent=0 // pred_check
    _
  $region11: #{reward_model_forward.1} parent=0 // pred_check_branch
    %19 = sbr.rel (0) target = $region13
  $region12: #{reward_model_forward.1} parent=0 // pred_region
    _
  $region13: #{reward_model_forward.1} parent=0 // pred_fallthru
    _
  // Predicated region
  $region14: #{reward_model_forward.1} parent=0 // pred_check
    _
  $region15: #{reward_model_forward.1} parent=0 // pred_check_branch
    %21 = sbr.rel (0) target = $region17
  $region16: #{reward_model_forward.1} parent=0 // pred_region
    _
  $region17: #{reward_model_forward.1} parent=0 // pred_fallthru
    _
  // Predicated region
  $region18: #{reward_model_forward.1} parent=0 // pred_check
    _
  $region19: #{reward_model_forward.1} parent=0 // pred_check_branch
    %23 = sbr.rel (0) target = $region21
  $region20: #{reward_model_forward.1} parent=0 // pred_region
    _
  $region21: #{reward_model_forward.1} parent=0 // pred_fallthru
    _
  // Predicated region
  $region22: #{reward_model_forward.1} parent=0 // pred_check
    _
  $region23: #{reward_model_forward.1} parent=0 // pred_check_branch
    %25 = sbr.rel (0) target = $region25
  $region24: #{reward_model_forward.1} parent=0 // pred_region
    _
  $region25: #{reward_model_forward.1} parent=0 // pred_fallthru
    _
  // Predicated region
  $region26: #{reward_model_forward.1} parent=0 // pred_check
    _
  $region27: #{reward_model_forward.1} parent=0 // pred_check_branch
    %27 = sbr.rel (0) target = $region29
  $region28: #{reward_model_forward.1} parent=0 // pred_region
    _
  $region29: #{reward_model_forward.1} parent=0 // pred_fallthru
    _
  %v29 = vld [vmem:[%s0] sm:$0xff]
  %v30 = vld [vmem:[%s0 + $0x8] sm:$0xff]
  %v31 = vld [vmem:[%s0 + $0x10] sm:$0xff]
  %v32 = vld [vmem:[%s0 + $0x18] sm:$0xff]
  %v33 = vld [vmem:[%s0 + $0x20] sm:$0xff]
  %v34 = vld [vmem:[%s0 + $0x28] sm:$0xff]
  %v35 = vld [vmem:[%s0 + $0x30] sm:$0xff]
  %v36 = vld [vmem:[%s0 + $0x38] sm:$0xff]
  %v37 = vld [vmem:[%s0 + $0x40] sm:$0xff]
  %v38 = vld [vmem:[%s0 + $0x48] sm:$0xff]
  %v39 = vld [vmem:[%s0 + $0x50] sm:$0xff]
  %v40 = vld [vmem:[%s0 + $0x58] sm:$0xff]
  %v41 = vld [vmem:[%s0 + $0x60] sm:$0xff]
  %v42 = vld [vmem:[%s0 + $0x68] sm:$0xff]
  %v43 = vld [vmem:[%s0 + $0x70] sm:$0xff]
  %v44 = vld [vmem:[%s0 + $0x78] sm:$0xff]
  %v45 = vld [vmem:[%s0 + $0x80] sm:$0xff]
  %v46 = vld [vmem:[%s0 + $0x88] sm:$0xff]
  %v47 = vld [vmem:[%s0 + $0x90] sm:$0xff]
  %v48 = vld [vmem:[%s0 + $0x98] sm:$0xff]
  %v49 = vld [vmem:[%s0 + $0xa0] sm:$0xff]
  %v50 = vld [vmem:[%s0 + $0xa8] sm:$0xff]
  %v51 = vld [vmem:[%s0 + $0xb0] sm:$0xff]
  %v52 = vld [vmem:[%s0 + $0xb8] sm:$0xff]
  %v53 = vld [vmem:[%s0 + $0xc0] sm:$0xff]
  %v54 = vld [vmem:[%s0 + $0xc8] sm:$0xff]
  %v55 = vld [vmem:[%s0 + $0xd0] sm:$0xff]
  %v56 = vld [vmem:[%s0 + $0xd8] sm:$0xff]
  %v57 = vld [vmem:[%s0 + $0xe0] sm:$0xff]
  %v58 = vld [vmem:[%s0 + $0xe8] sm:$0xff]
  %v59 = vld [vmem:[%s0 + $0xf0] sm:$0xff]
  %v60 = vld [vmem:[%s0 + $0xf8] sm:$0xff]
  %v61 = vpack.c.bf16 %v30, %v29
  %v62 = vpack.c.bf16 %v32, %v31
  %v63 = vpack.c.bf16 %v34, %v33
  %v64 = vpack.c.bf16 %v36, %v35
  %v65 = vpack.c.bf16 %v38, %v37
  %v66 = vpack.c.bf16 %v40, %v39
  %v67 = vpack.c.bf16 %v42, %v41
  %v68 = vpack.c.bf16 %v44, %v43
  %v69 = vpack.c.bf16 %v46, %v45
  %v70 = vpack.c.bf16 %v48, %v47
  %v71 = vpack.c.bf16 %v50, %v49
  %v72 = vpack.c.bf16 %v52, %v51
  %v73 = vpack.c.bf16 %v54, %v53
  %v74 = vpack.c.bf16 %v56, %v55
  %v75 = vpack.c.bf16 %v58, %v57
  %v76 = vpack.c.bf16 %v60, %v59
  %v77 = vld [vmem:[%s1] sm:$0xf]
  %v78 = vld [vmem:[%s1 + $0x4] sm:$0xf]
  %v79 = vld [vmem:[%s1 + $0x8] sm:$0xf]
  %v80 = vld [vmem:[%s1 + $0xc] sm:$0xf]
  %v81 = vld [vmem:[%s1 + $0x10] sm:$0xf]
  %v82 = vld [vmem:[%s1 + $0x14] sm:$0xf]
  %v83 = vld [vmem:[%s1 + $0x18] sm:$0xf]
  %v84 = vld [vmem:[%s1 + $0x1c] sm:$0xf]
  %v85 = vld [vmem:[%s1 + $0x20] sm:$0xf]
  %v86 = vld [vmem:[%s1 + $0x24] sm:$0xf]
  %v87 = vld [vmem:[%s1 + $0x28] sm:$0xf]
  %v88 = vld [vmem:[%s1 + $0x2c] sm:$0xf]
  %v89 = vld [vmem:[%s1 + $0x30] sm:$0xf]
  %v90 = vld [vmem:[%s1 + $0x34] sm:$0xf]
  %v91 = vld [vmem:[%s1 + $0x38] sm:$0xf]
  %v92 = vld [vmem:[%s1 + $0x3c] sm:$0xf]
  %v93 = vld [vmem:[%s1 + $0x40] sm:$0xf]
  %v94 = vld [vmem:[%s1 + $0x44] sm:$0xf]
  %v95 = vld [vmem:[%s1 + $0x48] sm:$0xf]
  %v96 = vld [vmem:[%s1 + $0x4c] sm:$0xf]
  %v97 = vld [vmem:[%s1 + $0x50] sm:$0xf]
  %v98 = vld [vmem:[%s1 + $0x54] sm:$0xf]
  %v99 = vld [vmem:[%s1 + $0x58] sm:$0xf]
  %v100 = vld [vmem:[%s1 + $0x5c] sm:$0xf]
  %v101 = vld [vmem:[%s1 + $0x60] sm:$0xf]
  %v102 = vld [vmem:[%s1 + $0x64] sm:$0xf]
  %v103 = vld [vmem:[%s1 + $0x68] sm:$0xf]
  %v104 = vld [vmem:[%s1 + $0x6c] sm:$0xf]
  %v105 = vld [vmem:[%s1 + $0x70] sm:$0xf]
  %v106 = vld [vmem:[%s1 + $0x74] sm:$0xf]
  %v107 = vld [vmem:[%s1 + $0x78] sm:$0xf]
  %v108 = vld [vmem:[%s1 + $0x7c] sm:$0xf]
  %v109 = vld [vmem:[%s2] sm:$0xff]
  %v110 = vld [vmem:[%s2 + $0x8] sm:$0xff]
  %v111 = vld [vmem:[%s2 + $0x10] sm:$0xff]
  %v112 = vld [vmem:[%s2 + $0x18] sm:$0xff]
  %v113 = vld [vmem:[%s2 + $0x20] sm:$0xff]
  %v114 = vld [vmem:[%s2 + $0x28] sm:$0xff]
  %v115 = vld [vmem:[%s2 + $0x30] sm:$0xff]
  %v116 = vld [vmem:[%s2 + $0x38] sm:$0xff]
  %v117 = vld [vmem:[%s2 + $0x40] sm:$0xff]
  %v118 = vld [vmem:[%s2 + $0x48] sm:$0xff]
  %v119 = vld [vmem:[%s2 + $0x50] sm:$0xff]
  %v120 = vld [vmem:[%s2 + $0x58] sm:$0xff]
  %v121 = vld [vmem:[%s2 + $0x60] sm:$0xff]
  %v122 = vld [vmem:[%s2 + $0x68] sm:$0xff]
  %v123 = vld [vmem:[%s2 + $0x70] sm:$0xff]
  %v124 = vld [vmem:[%s2 + $0x78] sm:$0xff]
  %v125 = vld [vmem:[%s2 + $0x80] sm:$0xff]
  %v126 = vld [vmem:[%s2 + $0x88] sm:$0xff]
  %v127 = vld [vmem:[%s2 + $0x90] sm:$0xff]
  %v128 = vld [vmem:[%s2 + $0x98] sm:$0xff]
  %v129 = vld [vmem:[%s2 + $0xa0] sm:$0xff]
  %v130 = vld [vmem:[%s2 + $0xa8] sm:$0xff]
  %v131 = vld [vmem:[%s2 + $0xb0] sm:$0xff]
  %v132 = vld [vmem:[%s2 + $0xb8] sm:$0xff]
  %v133 = vld [vmem:[%s2 + $0xc0] sm:$0xff]
  %v134 = vld [vmem:[%s2 + $0xc8] sm:$0xff]
  %v135 = vld [vmem:[%s2 + $0xd0] sm:$0xff]
  %v136 = vld [vmem:[%s2 + $0xd8] sm:$0xff]
  %v137 = vld [vmem:[%s2 + $0xe0] sm:$0xff]
  %v138 = vld [vmem:[%s2 + $0xe8] sm:$0xff]
  %v139 = vld [vmem:[%s2 + $0xf0] sm:$0xff]
  %v140 = vld [vmem:[%s2 + $0xf8] sm:$0xff]
  %142 = vset.pattern.permute.xlu0 0
  %143 = vperm.xlu0 %142, %v109
  %v144 = vpop.permute.xlu0 %143
  %147 = vset.pattern.permute.xlu0 0
  %148 = vperm.xlu0 %147, %v110
  %v149 = vpop.permute.xlu0 %148
  %152 = vset.pattern.permute.xlu0 0
  %153 = vperm.xlu0 %152, %v111
  %v154 = vpop.permute.xlu0 %153
  %157 = vset.pattern.permute.xlu0 0
  %158 = vperm.xlu0 %157, %v112
  %v159 = vpop.permute.xlu0 %158
  %162 = vset.pattern.permute.xlu0 0
  %163 = vperm.xlu0 %162, %v113
  %v164 = vpop.permute.xlu0 %163
  %167 = vset.pattern.permute.xlu0 0
  %168 = vperm.xlu0 %167, %v114
  %v169 = vpop.permute.xlu0 %168
  %172 = vset.pattern.permute.xlu0 0
  %173 = vperm.xlu0 %172, %v115
  %v174 = vpop.permute.xlu0 %173
  %177 = vset.pattern.permute.xlu0 0
  %178 = vperm.xlu0 %177, %v116
  %v179 = vpop.permute.xlu0 %178
  %182 = vset.pattern.permute.xlu0 0
  %183 = vperm.xlu0 %182, %v117
  %v184 = vpop.permute.xlu0 %183
  %187 = vset.pattern.permute.xlu0 0
  %188 = vperm.xlu0 %187, %v118
  %v189 = vpop.permute.xlu0 %188
  %192 = vset.pattern.permute.xlu0 0
  %193 = vperm.xlu0 %192, %v119
  %v194 = vpop.permute.xlu0 %193
  %197 = vset.pattern.permute.xlu0 0
  %198 = vperm.xlu0 %197, %v120
  %v199 = vpop.permute.xlu0 %198
  %202 = vset.pattern.permute.xlu0 0
  %203 = vperm.xlu0 %202, %v121
  %v204 = vpop.permute.xlu0 %203
  %207 = vset.pattern.permute.xlu0 0
  %208 = vperm.xlu0 %207, %v122
  %v209 = vpop.permute.xlu0 %208
  %212 = vset.pattern.permute.xlu0 0
  %213 = vperm.xlu0 %212, %v123
  %v214 = vpop.permute.xlu0 %213
  %217 = vset.pattern.permute.xlu0 0
  %218 = vperm.xlu0 %217, %v124
  %v219 = vpop.permute.xlu0 %218
  %222 = vset.pattern.permute.xlu0 0
  %223 = vperm.xlu0 %222, %v125
  %v224 = vpop.permute.xlu0 %223
  %227 = vset.pattern.permute.xlu0 0
  %228 = vperm.xlu0 %227, %v126
  %v229 = vpop.permute.xlu0 %228
  %232 = vset.pattern.permute.xlu0 0
  %233 = vperm.xlu0 %232, %v127
  %v234 = vpop.permute.xlu0 %233
  %237 = vset.pattern.permute.xlu0 0
  %238 = vperm.xlu0 %237, %v128
  %v239 = vpop.permute.xlu0 %238
  %242 = vset.pattern.permute.xlu0 0
  %243 = vperm.xlu0 %242, %v129
  %v244 = vpop.permute.xlu0 %243
  %247 = vset.pattern.permute.xlu0 0
  %248 = vperm.xlu0 %247, %v130
  %v249 = vpop.permute.xlu0 %248
  %252 = vset.pattern.permute.xlu0 0
  %253 = vperm.xlu0 %252, %v131
  %v254 = vpop.permute.xlu0 %253
  %257 = vset.pattern.permute.xlu0 0
  %258 = vperm.xlu0 %257, %v132
  %v259 = vpop.permute.xlu0 %258
  %262 = vset.pattern.permute.xlu0 0
  %263 = vperm.xlu0 %262, %v133
  %v264 = vpop.permute.xlu0 %263
  %267 = vset.pattern.permute.xlu0 0
  %268 = vperm.xlu0 %267, %v134
  %v269 = vpop.permute.xlu0 %268
  %272 = vset.pattern.permute.xlu0 0
  %273 = vperm.xlu0 %272, %v135
  %v274 = vpop.permute.xlu0 %273
  %277 = vset.pattern.permute.xlu0 0
  %278 = vperm.xlu0 %277, %v136
  %v279 = vpop.permute.xlu0 %278
  %282 = vset.pattern.permute.xlu0 0
  %283 = vperm.xlu0 %282, %v137
  %v284 = vpop.permute.xlu0 %283
  %287 = vset.pattern.permute.xlu0 0
  %288 = vperm.xlu0 %287, %v138
  %v289 = vpop.permute.xlu0 %288
  %292 = vset.pattern.permute.xlu0 0
  %293 = vperm.xlu0 %292, %v139
  %v294 = vpop.permute.xlu0 %293
  %297 = vset.pattern.permute.xlu0 0
  %298 = vperm.xlu0 %297, %v140
  %v299 = vpop.permute.xlu0 %298
  %v333 = vunpack.c.l.b16 %v77
  %v334 = vunpack.c.l.b16 %v78
  %v335 = vunpack.c.l.b16 %v79
  %v336 = vunpack.c.l.b16 %v80
  %v337 = vunpack.c.l.b16 %v81
  %v338 = vunpack.c.l.b16 %v82
  %v339 = vunpack.c.l.b16 %v83
  %v340 = vunpack.c.l.b16 %v84
  %v341 = vunpack.c.l.b16 %v85
  %v342 = vunpack.c.l.b16 %v86
  %v343 = vunpack.c.l.b16 %v87
  %v344 = vunpack.c.l.b16 %v88
  %v345 = vunpack.c.l.b16 %v89
  %v346 = vunpack.c.l.b16 %v90
  %v347 = vunpack.c.l.b16 %v91
  %v348 = vunpack.c.l.b16 %v92
  %v349 = vunpack.c.l.b16 %v93
  %v350 = vunpack.c.l.b16 %v94
  %v351 = vunpack.c.l.b16 %v95
  %v352 = vunpack.c.l.b16 %v96
  %v353 = vunpack.c.l.b16 %v97
  %v354 = vunpack.c.l.b16 %v98
  %v355 = vunpack.c.l.b16 %v99
  %v356 = vunpack.c.l.b16 %v100
  %v357 = vunpack.c.l.b16 %v101
  %v358 = vunpack.c.l.b16 %v102
  %v359 = vunpack.c.l.b16 %v103
  %v360 = vunpack.c.l.b16 %v104
  %v361 = vunpack.c.l.b16 %v105
  %v362 = vunpack.c.l.b16 %v106
  %v363 = vunpack.c.l.b16 %v107
  %v364 = vunpack.c.l.b16 %v108
  %v365 = vpack.c.b16 %v334, %v333
  %v366 = vpack.c.b16 %v336, %v335
  %v367 = vpack.c.b16 %v338, %v337
  %v368 = vpack.c.b16 %v340, %v339
  %v369 = vpack.c.b16 %v342, %v341
  %v370 = vpack.c.b16 %v344, %v343
  %v371 = vpack.c.b16 %v346, %v345
  %v372 = vpack.c.b16 %v348, %v347
  %v373 = vpack.c.b16 %v350, %v349
  %v374 = vpack.c.b16 %v352, %v351
  %v375 = vpack.c.b16 %v354, %v353
  %v376 = vpack.c.b16 %v356, %v355
  %v377 = vpack.c.b16 %v358, %v357
  %v378 = vpack.c.b16 %v360, %v359
  %v379 = vpack.c.b16 %v362, %v361
  %v380 = vpack.c.b16 %v364, %v363
  %vm381 = vcmask 261120
  %v383 = vsel %vm381, %v365, 0
  %v386 = vsel %vm381, %v366, 0
  %v389 = vsel %vm381, %v367, 0
  %v392 = vsel %vm381, %v368, 0
  %v395 = vsel %vm381, %v369, 0
  %v398 = vsel %vm381, %v370, 0
  %v401 = vsel %vm381, %v371, 0
  %v404 = vsel %vm381, %v372, 0
  %v407 = vsel %vm381, %v373, 0
  %v410 = vsel %vm381, %v374, 0
  %v413 = vsel %vm381, %v375, 0
  %v416 = vsel %vm381, %v376, 0
  %v419 = vsel %vm381, %v377, 0
  %v422 = vsel %vm381, %v378, 0
  %v425 = vsel %vm381, %v379, 0
  %v428 = vsel %vm381, %v380, 0
  %v431 = vsel %vm381, %v61, 0
  %v434 = vsel %vm381, %v62, 0
  %v437 = vsel %vm381, %v63, 0
  %v440 = vsel %vm381, %v64, 0
  %v443 = vsel %vm381, %v65, 0
  %v446 = vsel %vm381, %v66, 0
  %v449 = vsel %vm381, %v67, 0
  %v452 = vsel %vm381, %v68, 0
  %v455 = vsel %vm381, %v69, 0
  %v458 = vsel %vm381, %v70, 0
  %v461 = vsel %vm381, %v71, 0
  %v464 = vsel %vm381, %v72, 0
  %v467 = vsel %vm381, %v73, 0
  %v470 = vsel %vm381, %v74, 0
  %v473 = vsel %vm381, %v75, 0
  %v476 = vsel %vm381, %v76, 0
  %478 = vmatprep.subr.bf16.mxu0 0
  %479 = vmatpush1.bf16.xpose.msra.mxu0 %v452
  %480 = vmatprep.subr.bf16.mxu0 0
  %481 = vmatpush1.bf16.xpose.msra.mxu0 %v449
  %482 = vmatprep.subr.bf16.mxu0 0
  %483 = vmatpush1.bf16.xpose.msra.mxu0 %v446
  %484 = vmatprep.subr.bf16.mxu0 0
  %485 = vmatpush1.bf16.xpose.msra.mxu0 %v443
  %486 = vmatprep.subr.bf16.mxu0 0
  %487 = vmatpush1.bf16.xpose.msra.mxu0 %v440
  %488 = vmatprep.subr.bf16.mxu0 0
  %489 = vmatpush1.bf16.xpose.msra.mxu0 %v437
  %490 = vmatprep.subr.bf16.mxu0 0
  %491 = vmatpush1.bf16.xpose.msra.mxu0 %v434
  %492 = vmatprep.subr.bf16.mxu0 0
  %493 = vmatpush1.bf16.xpose.msra.mxu0 %v431
  %494 = vmatprep.subr.bf16.mxu0 0
  %495 = vmatpush2.bf16.xpose.msra.mxu0 %v476
  %496 = vmatprep.subr.bf16.mxu0 0
  %497 = vmatpush2.bf16.xpose.msra.mxu0 %v473
  %498 = vmatprep.subr.bf16.mxu0 0
  %499 = vmatpush2.bf16.xpose.msra.mxu0 %v470
  %500 = vmatprep.subr.bf16.mxu0 0
  %501 = vmatpush2.bf16.xpose.msra.mxu0 %v467
  %502 = vmatprep.subr.bf16.mxu0 0
  %503 = vmatpush2.bf16.xpose.msra.mxu0 %v464
  %504 = vmatprep.subr.bf16.mxu0 0
  %505 = vmatpush2.bf16.xpose.msra.mxu0 %v461
  %506 = vmatprep.subr.bf16.mxu0 0
  %507 = vmatpush2.bf16.xpose.msra.mxu0 %v458
  %508 = vmatprep.subr.bf16.mxu0 0
  %509 = vmatpush2.bf16.xpose.msra.mxu0 %v455
  %510 = vmatprep.mubr.bf16.mxu0 0
  %511 = vmatmul.mubr.bf16.gmra.mxu0 %v383
  %v512 = vpop.f32.mrf.mxu0
  %v513 = vadd.f32 %v144, %v512
  %v514 = vpop.f32.mrf.mxu0
  %v515 = vadd.f32 %v144, %v514
  %v516 = vpop.f32.mrf.mxu0
  %v517 = vadd.f32 %v149, %v516
  %v518 = vpop.f32.mrf.mxu0
  %v519 = vadd.f32 %v149, %v518
  %520 = vmatprep.mubr.bf16.mxu0 0
  %521 = vmatmul.mubr.bf16.gmra.mxu0 %v386
  %v522 = vpop.f32.mrf.mxu0
  %v523 = vadd.f32 %v154, %v522
  %v524 = vpop.f32.mrf.mxu0
  %v525 = vadd.f32 %v154, %v524
  %v526 = vpop.f32.mrf.mxu0
  %v527 = vadd.f32 %v159, %v526
  %v528 = vpop.f32.mrf.mxu0
  %v529 = vadd.f32 %v159, %v528
  %530 = vmatprep.mubr.bf16.mxu0 0
  %531 = vmatmul.mubr.bf16.gmra.mxu0 %v389
  %v532 = vpop.f32.mrf.mxu0
  %v533 = vadd.f32 %v164, %v532
  %v534 = vpop.f32.mrf.mxu0
  %v535 = vadd.f32 %v164, %v534
  %v536 = vpop.f32.mrf.mxu0
  %v537 = vadd.f32 %v169, %v536
  %v538 = vpop.f32.mrf.mxu0
  %v539 = vadd.f32 %v169, %v538
  %540 = vmatprep.mubr.bf16.mxu0 0
  %541 = vmatmul.mubr.bf16.gmra.mxu0 %v392
  %v542 = vpop.f32.mrf.mxu0
  %v543 = vadd.f32 %v174, %v542
  %v544 = vpop.f32.mrf.mxu0
  %v545 = vadd.f32 %v174, %v544
  %v546 = vpop.f32.mrf.mxu0
  %v547 = vadd.f32 %v179, %v546
  %v548 = vpop.f32.mrf.mxu0
  %v549 = vadd.f32 %v179, %v548
  %550 = vmatprep.mubr.bf16.mxu0 0
  %551 = vmatmul.mubr.bf16.gmra.mxu0 %v395
  %v552 = vpop.f32.mrf.mxu0
  %v553 = vadd.f32 %v184, %v552
  %v554 = vpop.f32.mrf.mxu0
  %v555 = vadd.f32 %v184, %v554
  %v556 = vpop.f32.mrf.mxu0
  %v557 = vadd.f32 %v189, %v556
  %v558 = vpop.f32.mrf.mxu0
  %v559 = vadd.f32 %v189, %v558
  %560 = vmatprep.mubr.bf16.mxu0 0
  %561 = vmatmul.mubr.bf16.gmra.mxu0 %v398
  %v562 = vpop.f32.mrf.mxu0
  %v563 = vadd.f32 %v194, %v562
  %v564 = vpop.f32.mrf.mxu0
  %v565 = vadd.f32 %v194, %v564
  %v566 = vpop.f32.mrf.mxu0
  %v567 = vadd.f32 %v199, %v566
  %v568 = vpop.f32.mrf.mxu0
  %v569 = vadd.f32 %v199, %v568
  %570 = vmatprep.mubr.bf16.mxu0 0
  %571 = vmatmul.mubr.bf16.gmra.mxu0 %v401
  %v572 = vpop.f32.mrf.mxu0
  %v573 = vadd.f32 %v204, %v572
  %v574 = vpop.f32.mrf.mxu0
  %v575 = vadd.f32 %v204, %v574
  %v576 = vpop.f32.mrf.mxu0
  %v577 = vadd.f32 %v209, %v576
  %v578 = vpop.f32.mrf.mxu0
  %v579 = vadd.f32 %v209, %v578
  %580 = vmatprep.mubr.bf16.mxu0 0
  %581 = vmatmul.mubr.bf16.gmra.mxu0 %v404
  %v582 = vpop.f32.mrf.mxu0
  %v583 = vadd.f32 %v214, %v582
  %v584 = vpop.f32.mrf.mxu0
  %v585 = vadd.f32 %v214, %v584
  %v586 = vpop.f32.mrf.mxu0
  %v587 = vadd.f32 %v219, %v586
  %v588 = vpop.f32.mrf.mxu0
  %v589 = vadd.f32 %v219, %v588
  %590 = vmatprep.mubr.bf16.mxu0 0
  %591 = vmatmul.mubr.bf16.gmra.mxu0 %v407
  %v592 = vpop.f32.mrf.mxu0
  %v593 = vadd.f32 %v224, %v592
  %v594 = vpop.f32.mrf.mxu0
  %v595 = vadd.f32 %v224, %v594
  %v596 = vpop.f32.mrf.mxu0
  %v597 = vadd.f32 %v229, %v596
  %v598 = vpop.f32.mrf.mxu0
  %v599 = vadd.f32 %v229, %v598
  %600 = vmatprep.mubr.bf16.mxu0 0
  %601 = vmatmul.mubr.bf16.gmra.mxu0 %v410
  %v602 = vpop.f32.mrf.mxu0
  %v603 = vadd.f32 %v234, %v602
  %v604 = vpop.f32.mrf.mxu0
  %v605 = vadd.f32 %v234, %v604
  %v606 = vpop.f32.mrf.mxu0
  %v607 = vadd.f32 %v239, %v606
  %v608 = vpop.f32.mrf.mxu0
  %v609 = vadd.f32 %v239, %v608
  %610 = vmatprep.mubr.bf16.mxu0 0
  %611 = vmatmul.mubr.bf16.gmra.mxu0 %v413
  %v612 = vpop.f32.mrf.mxu0
  %v613 = vadd.f32 %v244, %v612
  %v614 = vpop.f32.mrf.mxu0
  %v615 = vadd.f32 %v244, %v614
  %v616 = vpop.f32.mrf.mxu0
  %v617 = vadd.f32 %v249, %v616
  %v618 = vpop.f32.mrf.mxu0
  %v619 = vadd.f32 %v249, %v618
  %620 = vmatprep.mubr.bf16.mxu0 0
  %621 = vmatmul.mubr.bf16.gmra.mxu0 %v416
  %v622 = vpop.f32.mrf.mxu0
  %v623 = vadd.f32 %v254, %v622
  %v624 = vpop.f32.mrf.mxu0
  %v625 = vadd.f32 %v254, %v624
  %v626 = vpop.f32.mrf.mxu0
  %v627 = vadd.f32 %v259, %v626
  %v628 = vpop.f32.mrf.mxu0
  %v629 = vadd.f32 %v259, %v628
  %630 = vmatprep.mubr.bf16.mxu0 0
  %631 = vmatmul.mubr.bf16.gmra.mxu0 %v419
  %v632 = vpop.f32.mrf.mxu0
  %v633 = vadd.f32 %v264, %v632
  %v634 = vpop.f32.mrf.mxu0
  %v635 = vadd.f32 %v264, %v634
  %v636 = vpop.f32.mrf.mxu0
  %v637 = vadd.f32 %v269, %v636
  %v638 = vpop.f32.mrf.mxu0
  %v639 = vadd.f32 %v269, %v638
  %640 = vmatprep.mubr.bf16.mxu0 0
  %641 = vmatmul.mubr.bf16.gmra.mxu0 %v422
  %v642 = vpop.f32.mrf.mxu0
  %v643 = vadd.f32 %v274, %v642
  %v644 = vpop.f32.mrf.mxu0
  %v645 = vadd.f32 %v274, %v644
  %v646 = vpop.f32.mrf.mxu0
  %v647 = vadd.f32 %v279, %v646
  %v648 = vpop.f32.mrf.mxu0
  %v649 = vadd.f32 %v279, %v648
  %650 = vmatprep.mubr.bf16.mxu0 0
  %651 = vmatmul.mubr.bf16.gmra.mxu0 %v425
  %v652 = vpop.f32.mrf.mxu0
  %v653 = vadd.f32 %v284, %v652
  %v654 = vpop.f32.mrf.mxu0
  %v655 = vadd.f32 %v284, %v654
  %v656 = vpop.f32.mrf.mxu0
  %v657 = vadd.f32 %v289, %v656
  %v658 = vpop.f32.mrf.mxu0
  %v659 = vadd.f32 %v289, %v658
  %660 = vmatprep.mubr.bf16.mxu0 0
  %661 = vmatmul.mubr.bf16.gmra.mxu0 %v428
  %v662 = vpop.f32.mrf.mxu0
  %v663 = vadd.f32 %v294, %v662
  %v664 = vpop.f32.mrf.mxu0
  %v665 = vadd.f32 %v294, %v664
  %v666 = vpop.f32.mrf.mxu0
  %v667 = vadd.f32 %v299, %v666
  %v668 = vpop.f32.mrf.mxu0
  %v669 = vadd.f32 %v299, %v668
  %670 = vdwg.mxu0
  %v671 = vmax.f32 %v513, 0.0
  %v672 = vmax.f32 %v515, 0.0
  %v673 = vmax.f32 %v517, 0.0
  %v674 = vmax.f32 %v519, 0.0
  %v675 = vmax.f32 %v523, 0.0
  %v676 = vmax.f32 %v525, 0.0
  %v677 = vmax.f32 %v527, 0.0
  %v678 = vmax.f32 %v529, 0.0
  %v679 = vmax.f32 %v533, 0.0
  %v680 = vmax.f32 %v535, 0.0
  %v681 = vmax.f32 %v537, 0.0
  %v682 = vmax.f32 %v539, 0.0
  %v683 = vmax.f32 %v543, 0.0
  %v684 = vmax.f32 %v545, 0.0
  %v685 = vmax.f32 %v547, 0.0
  %v686 = vmax.f32 %v549, 0.0
  %v687 = vmax.f32 %v553, 0.0
  %v688 = vmax.f32 %v555, 0.0
  %v689 = vmax.f32 %v557, 0.0
  %v690 = vmax.f32 %v559, 0.0
  %v691 = vmax.f32 %v563, 0.0
  %v692 = vmax.f32 %v565, 0.0
  %v693 = vmax.f32 %v567, 0.0
  %v694 = vmax.f32 %v569, 0.0
  %v695 = vmax.f32 %v573, 0.0
  %v696 = vmax.f32 %v575, 0.0
  %v697 = vmax.f32 %v577, 0.0
  %v698 = vmax.f32 %v579, 0.0
  %v699 = vmax.f32 %v583, 0.0
  %v700 = vmax.f32 %v585, 0.0
  %v701 = vmax.f32 %v587, 0.0
  %v702 = vmax.f32 %v589, 0.0
  %v703 = vmax.f32 %v593, 0.0
  %v704 = vmax.f32 %v595, 0.0
  %v705 = vmax.f32 %v597, 0.0
  %v706 = vmax.f32 %v599, 0.0
  %v707 = vmax.f32 %v603, 0.0
  %v708 = vmax.f32 %v605, 0.0
  %v709 = vmax.f32 %v607, 0.0
  %v710 = vmax.f32 %v609, 0.0
  %v711 = vmax.f32 %v613, 0.0
  %v712 = vmax.f32 %v615, 0.0
  %v713 = vmax.f32 %v617, 0.0
  %v714 = vmax.f32 %v619, 0.0
  %v715 = vmax.f32 %v623, 0.0
  %v716 = vmax.f32 %v625, 0.0
  %v717 = vmax.f32 %v627, 0.0
  %v718 = vmax.f32 %v629, 0.0
  %v719 = vmax.f32 %v633, 0.0
  %v720 = vmax.f32 %v635, 0.0
  %v721 = vmax.f32 %v637, 0.0
  %v722 = vmax.f32 %v639, 0.0
  %v723 = vmax.f32 %v643, 0.0
  %v724 = vmax.f32 %v645, 0.0
  %v725 = vmax.f32 %v647, 0.0
  %v726 = vmax.f32 %v649, 0.0
  %v727 = vmax.f32 %v653, 0.0
  %v728 = vmax.f32 %v655, 0.0
  %v729 = vmax.f32 %v657, 0.0
  %v730 = vmax.f32 %v659, 0.0
  %v731 = vmax.f32 %v663, 0.0
  %v732 = vmax.f32 %v665, 0.0
  %v733 = vmax.f32 %v667, 0.0
  %v734 = vmax.f32 %v669, 0.0
  %v735 = vld [vmem:[%s3] sm:$0xff]
  %v736 = vld [vmem:[%s3 + $0x10] sm:$0xff]
  %v737 = vld [vmem:[%s3 + $0x20] sm:$0xff]
  %v738 = vld [vmem:[%s3 + $0x30] sm:$0xff]
  %v739 = vld [vmem:[%s3 + $0x40] sm:$0xff]
  %v740 = vld [vmem:[%s3 + $0x50] sm:$0xff]
  %v741 = vld [vmem:[%s3 + $0x60] sm:$0xff]
  %v742 = vld [vmem:[%s3 + $0x70] sm:$0xff]
  %v743 = vld [vmem:[%s3 + $0x80] sm:$0xff]
  %v744 = vld [vmem:[%s3 + $0x90] sm:$0xff]
  %v745 = vld [vmem:[%s3 + $0xa0] sm:$0xff]
  %v746 = vld [vmem:[%s3 + $0xb0] sm:$0xff]
  %v747 = vld [vmem:[%s3 + $0xc0] sm:$0xff]
  %v748 = vld [vmem:[%s3 + $0xd0] sm:$0xff]
  %v749 = vld [vmem:[%s3 + $0xe0] sm:$0xff]
  %v750 = vld [vmem:[%s3 + $0xf0] sm:$0xff]
  %v751 = vld [vmem:[%s3 + $0x100] sm:$0xff]
  %v752 = vld [vmem:[%s3 + $0x110] sm:$0xff]
  %v753 = vld [vmem:[%s3 + $0x120] sm:$0xff]
  %v754 = vld [vmem:[%s3 + $0x130] sm:$0xff]
  %v755 = vld [vmem:[%s3 + $0x140] sm:$0xff]
  %v756 = vld [vmem:[%s3 + $0x150] sm:$0xff]
  %v757 = vld [vmem:[%s3 + $0x160] sm:$0xff]
  %v758 = vld [vmem:[%s3 + $0x170] sm:$0xff]
  %v759 = vld [vmem:[%s3 + $0x180] sm:$0xff]
  %v760 = vld [vmem:[%s3 + $0x190] sm:$0xff]
  %v761 = vld [vmem:[%s3 + $0x1a0] sm:$0xff]
  %v762 = vld [vmem:[%s3 + $0x1b0] sm:$0xff]
  %v763 = vld [vmem:[%s3 + $0x1c0] sm:$0xff]
  %v764 = vld [vmem:[%s3 + $0x1d0] sm:$0xff]
  %v765 = vld [vmem:[%s3 + $0x1e0] sm:$0xff]
  %v766 = vld [vmem:[%s3 + $0x1f0] sm:$0xff]
  %v767 = vpack.c.bf16 %v673, %v671
  %v768 = vpack.c.bf16 %v674, %v672
  %v769 = vpack.c.bf16 %v677, %v675
  %v770 = vpack.c.bf16 %v678, %v676
  %v771 = vpack.c.bf16 %v681, %v679
  %v772 = vpack.c.bf16 %v682, %v680
  %v773 = vpack.c.bf16 %v685, %v683
  %v774 = vpack.c.bf16 %v686, %v684
  %v775 = vpack.c.bf16 %v689, %v687
  %v776 = vpack.c.bf16 %v690, %v688
  %v777 = vpack.c.bf16 %v693, %v691
  %v778 = vpack.c.bf16 %v694, %v692
  %v779 = vpack.c.bf16 %v697, %v695
  %v780 = vpack.c.bf16 %v698, %v696
  %v781 = vpack.c.bf16 %v701, %v699
  %v782 = vpack.c.bf16 %v702, %v700
  %v783 = vpack.c.bf16 %v705, %v703
  %v784 = vpack.c.bf16 %v706, %v704
  %v785 = vpack.c.bf16 %v709, %v707
  %v786 = vpack.c.bf16 %v710, %v708
  %v787 = vpack.c.bf16 %v713, %v711
  %v788 = vpack.c.bf16 %v714, %v712
  %v789 = vpack.c.bf16 %v717, %v715
  %v790 = vpack.c.bf16 %v718, %v716
  %v791 = vpack.c.bf16 %v721, %v719
  %v792 = vpack.c.bf16 %v722, %v720
  %v793 = vpack.c.bf16 %v725, %v723
  %v794 = vpack.c.bf16 %v726, %v724
  %v795 = vpack.c.bf16 %v729, %v727
  %v796 = vpack.c.bf16 %v730, %v728
  %v797 = vpack.c.bf16 %v733, %v731
  %v798 = vpack.c.bf16 %v734, %v732
  %v799 = vld [vmem:[%s1 + $0x80] sm:$0xf]
  %v800 = vld [vmem:[%s1 + $0x84] sm:$0xf]
  %v801 = vld [vmem:[%s1 + $0x88] sm:$0xf]
  %v802 = vld [vmem:[%s1 + $0x8c] sm:$0xf]
  %v803 = vld [vmem:[%s1 + $0x90] sm:$0xf]
  %v804 = vld [vmem:[%s1 + $0x94] sm:$0xf]
  %v805 = vld [vmem:[%s1 + $0x98] sm:$0xf]
  %v806 = vld [vmem:[%s1 + $0x9c] sm:$0xf]
  %v807 = vld [vmem:[%s1 + $0xa0] sm:$0xf]
  %v808 = vld [vmem:[%s1 + $0xa4] sm:$0xf]
  %v809 = vld [vmem:[%s1 + $0xa8] sm:$0xf]
  %v810 = vld [vmem:[%s1 + $0xac] sm:$0xf]
  %v811 = vld [vmem:[%s1 + $0xb0] sm:$0xf]
  %v812 = vld [vmem:[%s1 + $0xb4] sm:$0xf]
  %v813 = vld [vmem:[%s1 + $0xb8] sm:$0xf]
  %v814 = vld [vmem:[%s1 + $0xbc] sm:$0xf]
  %v815 = vld [vmem:[%s1 + $0xc0] sm:$0xf]
  %v816 = vld [vmem:[%s1 + $0xc4] sm:$0xf]
  %v817 = vld [vmem:[%s1 + $0xc8] sm:$0xf]
  %v818 = vld [vmem:[%s1 + $0xcc] sm:$0xf]
  %v819 = vld [vmem:[%s1 + $0xd0] sm:$0xf]
  %v820 = vld [vmem:[%s1 + $0xd4] sm:$0xf]
  %v821 = vld [vmem:[%s1 + $0xd8] sm:$0xf]
  %v822 = vld [vmem:[%s1 + $0xdc] sm:$0xf]
  %v823 = vld [vmem:[%s1 + $0xe0] sm:$0xf]
  %v824 = vld [vmem:[%s1 + $0xe4] sm:$0xf]
  %v825 = vld [vmem:[%s1 + $0xe8] sm:$0xf]
  %v826 = vld [vmem:[%s1 + $0xec] sm:$0xf]
  %v827 = vld [vmem:[%s1 + $0xf0] sm:$0xf]
  %v828 = vld [vmem:[%s1 + $0xf4] sm:$0xf]
  %v829 = vld [vmem:[%s1 + $0xf8] sm:$0xf]
  %v830 = vld [vmem:[%s1 + $0xfc] sm:$0xf]
  %v831 = vld [vmem:[%s2 + $0x100] sm:$0xff]
  %v832 = vld [vmem:[%s2 + $0x108] sm:$0xff]
  %v833 = vld [vmem:[%s2 + $0x110] sm:$0xff]
  %v834 = vld [vmem:[%s2 + $0x118] sm:$0xff]
  %v835 = vld [vmem:[%s2 + $0x120] sm:$0xff]
  %v836 = vld [vmem:[%s2 + $0x128] sm:$0xff]
  %v837 = vld [vmem:[%s2 + $0x130] sm:$0xff]
  %v838 = vld [vmem:[%s2 + $0x138] sm:$0xff]
  %v839 = vld [vmem:[%s2 + $0x140] sm:$0xff]
  %v840 = vld [vmem:[%s2 + $0x148] sm:$0xff]
  %v841 = vld [vmem:[%s2 + $0x150] sm:$0xff]
  %v842 = vld [vmem:[%s2 + $0x158] sm:$0xff]
  %v843 = vld [vmem:[%s2 + $0x160] sm:$0xff]
  %v844 = vld [vmem:[%s2 + $0x168] sm:$0xff]
  %v845 = vld [vmem:[%s2 + $0x170] sm:$0xff]
  %v846 = vld [vmem:[%s2 + $0x178] sm:$0xff]
  %v847 = vld [vmem:[%s2 + $0x180] sm:$0xff]
  %v848 = vld [vmem:[%s2 + $0x188] sm:$0xff]
  %v849 = vld [vmem:[%s2 + $0x190] sm:$0xff]
  %v850 = vld [vmem:[%s2 + $0x198] sm:$0xff]
  %v851 = vld [vmem:[%s2 + $0x1a0] sm:$0xff]
  %v852 = vld [vmem:[%s2 + $0x1a8] sm:$0xff]
  %v853 = vld [vmem:[%s2 + $0x1b0] sm:$0xff]
  %v854 = vld [vmem:[%s2 + $0x1b8] sm:$0xff]
  %v855 = vld [vmem:[%s2 + $0x1c0] sm:$0xff]
  %v856 = vld [vmem:[%s2 + $0x1c8] sm:$0xff]
  %v857 = vld [vmem:[%s2 + $0x1d0] sm:$0xff]
  %v858 = vld [vmem:[%s2 + $0x1d8] sm:$0xff]
  %v859 = vld [vmem:[%s2 + $0x1e0] sm:$0xff]
  %v860 = vld [vmem:[%s2 + $0x1e8] sm:$0xff]
  %v861 = vld [vmem:[%s2 + $0x1f0] sm:$0xff]
  %v862 = vld [vmem:[%s2 + $0x1f8] sm:$0xff]
  %864 = vset.pattern.permute.xlu0 0
  %865 = vperm.xlu0 %864, %v831
  %v866 = vpop.permute.xlu0 %865
  %869 = vset.pattern.permute.xlu0 0
  %870 = vperm.xlu0 %869, %v832
  %v871 = vpop.permute.xlu0 %870
  %874 = vset.pattern.permute.xlu0 0
  %875 = vperm.xlu0 %874, %v833
  %v876 = vpop.permute.xlu0 %875
  %879 = vset.pattern.permute.xlu0 0
  %880 = vperm.xlu0 %879, %v834
  %v881 = vpop.permute.xlu0 %880
  %884 = vset.pattern.permute.xlu0 0
  %885 = vperm.xlu0 %884, %v835
  %v886 = vpop.permute.xlu0 %885
  %889 = vset.pattern.permute.xlu0 0
  %890 = vperm.xlu0 %889, %v836
  %v891 = vpop.permute.xlu0 %890
  %894 = vset.pattern.permute.xlu0 0
  %895 = vperm.xlu0 %894, %v837
  %v896 = vpop.permute.xlu0 %895
  %899 = vset.pattern.permute.xlu0 0
  %900 = vperm.xlu0 %899, %v838
  %v901 = vpop.permute.xlu0 %900
  %904 = vset.pattern.permute.xlu0 0
  %905 = vperm.xlu0 %904, %v839
  %v906 = vpop.permute.xlu0 %905
  %909 = vset.pattern.permute.xlu0 0
  %910 = vperm.xlu0 %909, %v840
  %v911 = vpop.permute.xlu0 %910
  %914 = vset.pattern.permute.xlu0 0
  %915 = vperm.xlu0 %914, %v841
  %v916 = vpop.permute.xlu0 %915
  %919 = vset.pattern.permute.xlu0 0
  %920 = vperm.xlu0 %919, %v842
  %v921 = vpop.permute.xlu0 %920
  %924 = vset.pattern.permute.xlu0 0
  %925 = vperm.xlu0 %924, %v843
  %v926 = vpop.permute.xlu0 %925
  %929 = vset.pattern.permute.xlu0 0
  %930 = vperm.xlu0 %929, %v844
  %v931 = vpop.permute.xlu0 %930
  %934 = vset.pattern.permute.xlu0 0
  %935 = vperm.xlu0 %934, %v845
  %v936 = vpop.permute.xlu0 %935
  %939 = vset.pattern.permute.xlu0 0
  %940 = vperm.xlu0 %939, %v846
  %v941 = vpop.permute.xlu0 %940
  %944 = vset.pattern.permute.xlu0 0
  %945 = vperm.xlu0 %944, %v847
  %v946 = vpop.permute.xlu0 %945
  %949 = vset.pattern.permute.xlu0 0
  %950 = vperm.xlu0 %949, %v848
  %v951 = vpop.permute.xlu0 %950
  %954 = vset.pattern.permute.xlu0 0
  %955 = vperm.xlu0 %954, %v849
  %v956 = vpop.permute.xlu0 %955
  %959 = vset.pattern.permute.xlu0 0
  %960 = vperm.xlu0 %959, %v850
  %v961 = vpop.permute.xlu0 %960
  %964 = vset.pattern.permute.xlu0 0
  %965 = vperm.xlu0 %964, %v851
  %v966 = vpop.permute.xlu0 %965
  %969 = vset.pattern.permute.xlu0 0
  %970 = vperm.xlu0 %969, %v852
  %v971 = vpop.permute.xlu0 %970
  %974 = vset.pattern.permute.xlu0 0
  %975 = vperm.xlu0 %974, %v853
  %v976 = vpop.permute.xlu0 %975
  %979 = vset.pattern.permute.xlu0 0
  %980 = vperm.xlu0 %979, %v854
  %v981 = vpop.permute.xlu0 %980
  %984 = vset.pattern.permute.xlu0 0
  %985 = vperm.xlu0 %984, %v855
  %v986 = vpop.permute.xlu0 %985
  %989 = vset.pattern.permute.xlu0 0
  %990 = vperm.xlu0 %989, %v856
  %v991 = vpop.permute.xlu0 %990
  %994 = vset.pattern.permute.xlu0 0
  %995 = vperm.xlu0 %994, %v857
  %v996 = vpop.permute.xlu0 %995
  %999 = vset.pattern.permute.xlu0 0
  %1000 = vperm.xlu0 %999, %v858
  %v1001 = vpop.permute.xlu0 %1000
  %1004 = vset.pattern.permute.xlu0 0
  %1005 = vperm.xlu0 %1004, %v859
  %v1006 = vpop.permute.xlu0 %1005
  %1009 = vset.pattern.permute.xlu0 0
  %1010 = vperm.xlu0 %1009, %v860
  %v1011 = vpop.permute.xlu0 %1010
  %1014 = vset.pattern.permute.xlu0 0
  %1015 = vperm.xlu0 %1014, %v861
  %v1016 = vpop.permute.xlu0 %1015
  %1019 = vset.pattern.permute.xlu0 0
  %1020 = vperm.xlu0 %1019, %v862
  %v1021 = vpop.permute.xlu0 %1020
  %v1055 = vunpack.c.l.b16 %v799
  %v1056 = vunpack.c.l.b16 %v800
  %v1057 = vunpack.c.l.b16 %v801
  %v1058 = vunpack.c.l.b16 %v802
  %v1059 = vunpack.c.l.b16 %v803
  %v1060 = vunpack.c.l.b16 %v804
  %v1061 = vunpack.c.l.b16 %v805
  %v1062 = vunpack.c.l.b16 %v806
  %v1063 = vunpack.c.l.b16 %v807
  %v1064 = vunpack.c.l.b16 %v808
  %v1065 = vunpack.c.l.b16 %v809
  %v1066 = vunpack.c.l.b16 %v810
  %v1067 = vunpack.c.l.b16 %v811
  %v1068 = vunpack.c.l.b16 %v812
  %v1069 = vunpack.c.l.b16 %v813
  %v1070 = vunpack.c.l.b16 %v814
  %v1071 = vunpack.c.l.b16 %v815
  %v1072 = vunpack.c.l.b16 %v816
  %v1073 = vunpack.c.l.b16 %v817
  %v1074 = vunpack.c.l.b16 %v818
  %v1075 = vunpack.c.l.b16 %v819
  %v1076 = vunpack.c.l.b16 %v820
  %v1077 = vunpack.c.l.b16 %v821
  %v1078 = vunpack.c.l.b16 %v822
  %v1079 = vunpack.c.l.b16 %v823
  %v1080 = vunpack.c.l.b16 %v824
  %v1081 = vunpack.c.l.b16 %v825
  %v1082 = vunpack.c.l.b16 %v826
  %v1083 = vunpack.c.l.b16 %v827
  %v1084 = vunpack.c.l.b16 %v828
  %v1085 = vunpack.c.l.b16 %v829
  %v1086 = vunpack.c.l.b16 %v830
  %v1087 = vpack.c.b16 %v1056, %v1055
  %v1088 = vpack.c.b16 %v1058, %v1057
  %v1089 = vpack.c.b16 %v1060, %v1059
  %v1090 = vpack.c.b16 %v1062, %v1061
  %v1091 = vpack.c.b16 %v1064, %v1063
  %v1092 = vpack.c.b16 %v1066, %v1065
  %v1093 = vpack.c.b16 %v1068, %v1067
  %v1094 = vpack.c.b16 %v1070, %v1069
  %v1095 = vpack.c.b16 %v1072, %v1071
  %v1096 = vpack.c.b16 %v1074, %v1073
  %v1097 = vpack.c.b16 %v1076, %v1075
  %v1098 = vpack.c.b16 %v1078, %v1077
  %v1099 = vpack.c.b16 %v1080, %v1079
  %v1100 = vpack.c.b16 %v1082, %v1081
  %v1101 = vpack.c.b16 %v1084, %v1083
  %v1102 = vpack.c.b16 %v1086, %v1085
  %v1104 = vsel %vm381, %v1087, 0
  %v1107 = vsel %vm381, %v1088, 0
  %v1110 = vsel %vm381, %v1089, 0
  %v1113 = vsel %vm381, %v1090, 0
  %v1116 = vsel %vm381, %v1091, 0
  %v1119 = vsel %vm381, %v1092, 0
  %v1122 = vsel %vm381, %v1093, 0
  %v1125 = vsel %vm381, %v1094, 0
  %v1128 = vsel %vm381, %v1095, 0
  %v1131 = vsel %vm381, %v1096, 0
  %v1134 = vsel %vm381, %v1097, 0
  %v1137 = vsel %vm381, %v1098, 0
  %v1140 = vsel %vm381, %v1099, 0
  %v1143 = vsel %vm381, %v1100, 0
  %v1146 = vsel %vm381, %v1101, 0
  %v1149 = vsel %vm381, %v1102, 0
  %1151 = vmatprep.subr.bf16.mxu0 0
  %1152 = vmatpush1.bf16.xpose.msra.mxu0 %v452
  %1153 = vmatprep.subr.bf16.mxu0 0
  %1154 = vmatpush1.bf16.xpose.msra.mxu0 %v449
  %1155 = vmatprep.subr.bf16.mxu0 0
  %1156 = vmatpush1.bf16.xpose.msra.mxu0 %v446
  %1157 = vmatprep.subr.bf16.mxu0 0
  %1158 = vmatpush1.bf16.xpose.msra.mxu0 %v443
  %1159 = vmatprep.subr.bf16.mxu0 0
  %1160 = vmatpush1.bf16.xpose.msra.mxu0 %v440
  %1161 = vmatprep.subr.bf16.mxu0 0
  %1162 = vmatpush1.bf16.xpose.msra.mxu0 %v437
  %1163 = vmatprep.subr.bf16.mxu0 0
  %1164 = vmatpush1.bf16.xpose.msra.mxu0 %v434
  %1165 = vmatprep.subr.bf16.mxu0 0
  %1166 = vmatpush1.bf16.xpose.msra.mxu0 %v431
  %1167 = vmatprep.subr.bf16.mxu0 0
  %1168 = vmatpush2.bf16.xpose.msra.mxu0 %v476
  %1169 = vmatprep.subr.bf16.mxu0 0
  %1170 = vmatpush2.bf16.xpose.msra.mxu0 %v473
  %1171 = vmatprep.subr.bf16.mxu0 0
  %1172 = vmatpush2.bf16.xpose.msra.mxu0 %v470
  %1173 = vmatprep.subr.bf16.mxu0 0
  %1174 = vmatpush2.bf16.xpose.msra.mxu0 %v467
  %1175 = vmatprep.subr.bf16.mxu0 0
  %1176 = vmatpush2.bf16.xpose.msra.mxu0 %v464
  %1177 = vmatprep.subr.bf16.mxu0 0
  %1178 = vmatpush2.bf16.xpose.msra.mxu0 %v461
  %1179 = vmatprep.subr.bf16.mxu0 0
  %1180 = vmatpush2.bf16.xpose.msra.mxu0 %v458
  %1181 = vmatprep.subr.bf16.mxu0 0
  %1182 = vmatpush2.bf16.xpose.msra.mxu0 %v455
  %1183 = vmatprep.mubr.bf16.mxu0 0
  %1184 = vmatmul.mubr.bf16.gmra.mxu0 %v1104
  %v1185 = vpop.f32.mrf.mxu0
  %v1186 = vadd.f32 %v866, %v1185
  %v1187 = vpop.f32.mrf.mxu0
  %v1188 = vadd.f32 %v866, %v1187
  %v1189 = vpop.f32.mrf.mxu0
  %v1190 = vadd.f32 %v871, %v1189
  %v1191 = vpop.f32.mrf.mxu0
  %v1192 = vadd.f32 %v871, %v1191
  %1193 = vmatprep.mubr.bf16.mxu0 0
  %1194 = vmatmul.mubr.bf16.gmra.mxu0 %v1107
  %v1195 = vpop.f32.mrf.mxu0
  %v1196 = vadd.f32 %v876, %v1195
  %v1197 = vpop.f32.mrf.mxu0
  %v1198 = vadd.f32 %v876, %v1197
  %v1199 = vpop.f32.mrf.mxu0
  %v1200 = vadd.f32 %v881, %v1199
  %v1201 = vpop.f32.mrf.mxu0
  %v1202 = vadd.f32 %v881, %v1201
  %1203 = vmatprep.mubr.bf16.mxu0 0
  %1204 = vmatmul.mubr.bf16.gmra.mxu0 %v1110
  %v1205 = vpop.f32.mrf.mxu0
  %v1206 = vadd.f32 %v886, %v1205
  %v1207 = vpop.f32.mrf.mxu0
  %v1208 = vadd.f32 %v886, %v1207
  %v1209 = vpop.f32.mrf.mxu0
  %v1210 = vadd.f32 %v891, %v1209
  %v1211 = vpop.f32.mrf.mxu0
  %v1212 = vadd.f32 %v891, %v1211
  %1213 = vmatprep.mubr.bf16.mxu0 0
  %1214 = vmatmul.mubr.bf16.gmra.mxu0 %v1113
  %v1215 = vpop.f32.mrf.mxu0
  %v1216 = vadd.f32 %v896, %v1215
  %v1217 = vpop.f32.mrf.mxu0
  %v1218 = vadd.f32 %v896, %v1217
  %v1219 = vpop.f32.mrf.mxu0
  %v1220 = vadd.f32 %v901, %v1219
  %v1221 = vpop.f32.mrf.mxu0
  %v1222 = vadd.f32 %v901, %v1221
  %1223 = vmatprep.mubr.bf16.mxu0 0
  %1224 = vmatmul.mubr.bf16.gmra.mxu0 %v1116
  %v1225 = vpop.f32.mrf.mxu0
  %v1226 = vadd.f32 %v906, %v1225
  %v1227 = vpop.f32.mrf.mxu0
  %v1228 = vadd.f32 %v906, %v1227
  %v1229 = vpop.f32.mrf.mxu0
  %v1230 = vadd.f32 %v911, %v1229
  %v1231 = vpop.f32.mrf.mxu0
  %v1232 = vadd.f32 %v911, %v1231
  %1233 = vmatprep.mubr.bf16.mxu0 0
  %1234 = vmatmul.mubr.bf16.gmra.mxu0 %v1119
  %v1235 = vpop.f32.mrf.mxu0
  %v1236 = vadd.f32 %v916, %v1235
  %v1237 = vpop.f32.mrf.mxu0
  %v1238 = vadd.f32 %v916, %v1237
  %v1239 = vpop.f32.mrf.mxu0
  %v1240 = vadd.f32 %v921, %v1239
  %v1241 = vpop.f32.mrf.mxu0
  %v1242 = vadd.f32 %v921, %v1241
  %1243 = vmatprep.mubr.bf16.mxu0 0
  %1244 = vmatmul.mubr.bf16.gmra.mxu0 %v1122
  %v1245 = vpop.f32.mrf.mxu0
  %v1246 = vadd.f32 %v926, %v1245
  %v1247 = vpop.f32.mrf.mxu0
  %v1248 = vadd.f32 %v926, %v1247
  %v1249 = vpop.f32.mrf.mxu0
  %v1250 = vadd.f32 %v931, %v1249
  %v1251 = vpop.f32.mrf.mxu0
  %v1252 = vadd.f32 %v931, %v1251
  %1253 = vmatprep.mubr.bf16.mxu0 0
  %1254 = vmatmul.mubr.bf16.gmra.mxu0 %v1125
  %v1255 = vpop.f32.mrf.mxu0
  %v1256 = vadd.f32 %v936, %v1255
  %v1257 = vpop.f32.mrf.mxu0
  %v1258 = vadd.f32 %v936, %v1257
  %v1259 = vpop.f32.mrf.mxu0
  %v1260 = vadd.f32 %v941, %v1259
  %v1261 = vpop.f32.mrf.mxu0
  %v1262 = vadd.f32 %v941, %v1261
  %1263 = vmatprep.mubr.bf16.mxu0 0
  %1264 = vmatmul.mubr.bf16.gmra.mxu0 %v1128
  %v1265 = vpop.f32.mrf.mxu0
  %v1266 = vadd.f32 %v946, %v1265
  %v1267 = vpop.f32.mrf.mxu0
  %v1268 = vadd.f32 %v946, %v1267
  %v1269 = vpop.f32.mrf.mxu0
  %v1270 = vadd.f32 %v951, %v1269
  %v1271 = vpop.f32.mrf.mxu0
  %v1272 = vadd.f32 %v951, %v1271
  %1273 = vmatprep.mubr.bf16.mxu0 0
  %1274 = vmatmul.mubr.bf16.gmra.mxu0 %v1131
  %v1275 = vpop.f32.mrf.mxu0
  %v1276 = vadd.f32 %v956, %v1275
  %v1277 = vpop.f32.mrf.mxu0
  %v1278 = vadd.f32 %v956, %v1277
  %v1279 = vpop.f32.mrf.mxu0
  %v1280 = vadd.f32 %v961, %v1279
  %v1281 = vpop.f32.mrf.mxu0
  %v1282 = vadd.f32 %v961, %v1281
  %1283 = vmatprep.mubr.bf16.mxu0 0
  %1284 = vmatmul.mubr.bf16.gmra.mxu0 %v1134
  %v1285 = vpop.f32.mrf.mxu0
  %v1286 = vadd.f32 %v966, %v1285
  %v1287 = vpop.f32.mrf.mxu0
  %v1288 = vadd.f32 %v966, %v1287
  %v1289 = vpop.f32.mrf.mxu0
  %v1290 = vadd.f32 %v971, %v1289
  %v1291 = vpop.f32.mrf.mxu0
  %v1292 = vadd.f32 %v971, %v1291
  %1293 = vmatprep.mubr.bf16.mxu0 0
  %1294 = vmatmul.mubr.bf16.gmra.mxu0 %v1137
  %v1295 = vpop.f32.mrf.mxu0
  %v1296 = vadd.f32 %v976, %v1295
  %v1297 = vpop.f32.mrf.mxu0
  %v1298 = vadd.f32 %v976, %v1297
  %v1299 = vpop.f32.mrf.mxu0
  %v1300 = vadd.f32 %v981, %v1299
  %v1301 = vpop.f32.mrf.mxu0
  %v1302 = vadd.f32 %v981, %v1301
  %1303 = vmatprep.mubr.bf16.mxu0 0
  %1304 = vmatmul.mubr.bf16.gmra.mxu0 %v1140
  %v1305 = vpop.f32.mrf.mxu0
  %v1306 = vadd.f32 %v986, %v1305
  %v1307 = vpop.f32.mrf.mxu0
  %v1308 = vadd.f32 %v986, %v1307
  %v1309 = vpop.f32.mrf.mxu0
  %v1310 = vadd.f32 %v991, %v1309
  %v1311 = vpop.f32.mrf.mxu0
  %v1312 = vadd.f32 %v991, %v1311
  %1313 = vmatprep.mubr.bf16.mxu0 0
  %1314 = vmatmul.mubr.bf16.gmra.mxu0 %v1143
  %v1315 = vpop.f32.mrf.mxu0
  %v1316 = vadd.f32 %v996, %v1315
  %v1317 = vpop.f32.mrf.mxu0
  %v1318 = vadd.f32 %v996, %v1317
  %v1319 = vpop.f32.mrf.mxu0
  %v1320 = vadd.f32 %v1001, %v1319
  %v1321 = vpop.f32.mrf.mxu0
  %v1322 = vadd.f32 %v1001, %v1321
  %1323 = vmatprep.mubr.bf16.mxu0 0
  %1324 = vmatmul.mubr.bf16.gmra.mxu0 %v1146
  %v1325 = vpop.f32.mrf.mxu0
  %v1326 = vadd.f32 %v1006, %v1325
  %v1327 = vpop.f32.mrf.mxu0
  %v1328 = vadd.f32 %v1006, %v1327
  %v1329 = vpop.f32.mrf.mxu0
  %v1330 = vadd.f32 %v1011, %v1329
  %v1331 = vpop.f32.mrf.mxu0
  %v1332 = vadd.f32 %v1011, %v1331
  %1333 = vmatprep.mubr.bf16.mxu0 0
  %1334 = vmatmul.mubr.bf16.gmra.mxu0 %v1149
  %v1335 = vpop.f32.mrf.mxu0
  %v1336 = vadd.f32 %v1016, %v1335
  %v1337 = vpop.f32.mrf.mxu0
  %v1338 = vadd.f32 %v1016, %v1337
  %v1339 = vpop.f32.mrf.mxu0
  %v1340 = vadd.f32 %v1021, %v1339
  %v1341 = vpop.f32.mrf.mxu0
  %v1342 = vadd.f32 %v1021, %v1341
  %1343 = vdwg.mxu0
  %v1344 = vmax.f32 %v1186, 0.0
  %v1345 = vmax.f32 %v1188, 0.0
  %v1346 = vmax.f32 %v1190, 0.0
  %v1347 = vmax.f32 %v1192, 0.0
  %v1348 = vmax.f32 %v1196, 0.0
  %v1349 = vmax.f32 %v1198, 0.0
  %v1350 = vmax.f32 %v1200, 0.0
  %v1351 = vmax.f32 %v1202, 0.0
  %v1352 = vmax.f32 %v1206, 0.0
  %v1353 = vmax.f32 %v1208, 0.0
  %v1354 = vmax.f32 %v1210, 0.0
  %v1355 = vmax.f32 %v1212, 0.0
  %v1356 = vmax.f32 %v1216, 0.0
  %v1357 = vmax.f32 %v1218, 0.0
  %v1358 = vmax.f32 %v1220, 0.0
  %v1359 = vmax.f32 %v1222, 0.0
  %v1360 = vmax.f32 %v1226, 0.0
  %v1361 = vmax.f32 %v1228, 0.0
  %v1362 = vmax.f32 %v1230, 0.0
  %v1363 = vmax.f32 %v1232, 0.0
  %v1364 = vmax.f32 %v1236, 0.0
  %v1365 = vmax.f32 %v1238, 0.0
  %v1366 = vmax.f32 %v1240, 0.0
  %v1367 = vmax.f32 %v1242, 0.0
  %v1368 = vmax.f32 %v1246, 0.0
  %v1369 = vmax.f32 %v1248, 0.0
  %v1370 = vmax.f32 %v1250, 0.0
  %v1371 = vmax.f32 %v1252, 0.0
  %v1372 = vmax.f32 %v1256, 0.0
  %v1373 = vmax.f32 %v1258, 0.0
  %v1374 = vmax.f32 %v1260, 0.0
  %v1375 = vmax.f32 %v1262, 0.0
  %v1376 = vmax.f32 %v1266, 0.0
  %v1377 = vmax.f32 %v1268, 0.0
  %v1378 = vmax.f32 %v1270, 0.0
  %v1379 = vmax.f32 %v1272, 0.0
  %v1380 = vmax.f32 %v1276, 0.0
  %v1381 = vmax.f32 %v1278, 0.0
  %v1382 = vmax.f32 %v1280, 0.0
  %v1383 = vmax.f32 %v1282, 0.0
  %v1384 = vmax.f32 %v1286, 0.0
  %v1385 = vmax.f32 %v1288, 0.0
  %v1386 = vmax.f32 %v1290, 0.0
  %v1387 = vmax.f32 %v1292, 0.0
  %v1388 = vmax.f32 %v1296, 0.0
  %v1389 = vmax.f32 %v1298, 0.0
  %v1390 = vmax.f32 %v1300, 0.0
  %v1391 = vmax.f32 %v1302, 0.0
  %v1392 = vmax.f32 %v1306, 0.0
  %v1393 = vmax.f32 %v1308, 0.0
  %v1394 = vmax.f32 %v1310, 0.0
  %v1395 = vmax.f32 %v1312, 0.0
  %v1396 = vmax.f32 %v1316, 0.0
  %v1397 = vmax.f32 %v1318, 0.0
  %v1398 = vmax.f32 %v1320, 0.0
  %v1399 = vmax.f32 %v1322, 0.0
  %v1400 = vmax.f32 %v1326, 0.0
  %v1401 = vmax.f32 %v1328, 0.0
  %v1402 = vmax.f32 %v1330, 0.0
  %v1403 = vmax.f32 %v1332, 0.0
  %v1404 = vmax.f32 %v1336, 0.0
  %v1405 = vmax.f32 %v1338, 0.0
  %v1406 = vmax.f32 %v1340, 0.0
  %v1407 = vmax.f32 %v1342, 0.0
  %v1408 = vld [vmem:[%s3 + $0x8] sm:$0xff]
  %v1409 = vld [vmem:[%s3 + $0x18] sm:$0xff]
  %v1410 = vld [vmem:[%s3 + $0x28] sm:$0xff]
  %v1411 = vld [vmem:[%s3 + $0x38] sm:$0xff]
  %v1412 = vld [vmem:[%s3 + $0x48] sm:$0xff]
  %v1413 = vld [vmem:[%s3 + $0x58] sm:$0xff]
  %v1414 = vld [vmem:[%s3 + $0x68] sm:$0xff]
  %v1415 = vld [vmem:[%s3 + $0x78] sm:$0xff]
  %v1416 = vld [vmem:[%s3 + $0x88] sm:$0xff]
  %v1417 = vld [vmem:[%s3 + $0x98] sm:$0xff]
  %v1418 = vld [vmem:[%s3 + $0xa8] sm:$0xff]
  %v1419 = vld [vmem:[%s3 + $0xb8] sm:$0xff]
  %v1420 = vld [vmem:[%s3 + $0xc8] sm:$0xff]
  %v1421 = vld [vmem:[%s3 + $0xd8] sm:$0xff]
  %v1422 = vld [vmem:[%s3 + $0xe8] sm:$0xff]
  %v1423 = vld [vmem:[%s3 + $0xf8] sm:$0xff]
  %v1424 = vld [vmem:[%s3 + $0x108] sm:$0xff]
  %v1425 = vld [vmem:[%s3 + $0x118] sm:$0xff]
  %v1426 = vld [vmem:[%s3 + $0x128] sm:$0xff]
  %v1427 = vld [vmem:[%s3 + $0x138] sm:$0xff]
  %v1428 = vld [vmem:[%s3 + $0x148] sm:$0xff]
  %v1429 = vld [vmem:[%s3 + $0x158] sm:$0xff]
  %v1430 = vld [vmem:[%s3 + $0x168] sm:$0xff]
  %v1431 = vld [vmem:[%s3 + $0x178] sm:$0xff]
  %v1432 = vld [vmem:[%s3 + $0x188] sm:$0xff]
  %v1433 = vld [vmem:[%s3 + $0x198] sm:$0xff]
  %v1434 = vld [vmem:[%s3 + $0x1a8] sm:$0xff]
  %v1435 = vld [vmem:[%s3 + $0x1b8] sm:$0xff]
  %v1436 = vld [vmem:[%s3 + $0x1c8] sm:$0xff]
  %v1437 = vld [vmem:[%s3 + $0x1d8] sm:$0xff]
  %v1438 = vld [vmem:[%s3 + $0x1e8] sm:$0xff]
  %v1439 = vld [vmem:[%s3 + $0x1f8] sm:$0xff]
  %v1440 = vpack.c.bf16 %v1346, %v1344
  %v1441 = vpack.c.bf16 %v1347, %v1345
  %v1442 = vpack.c.bf16 %v1350, %v1348
  %v1443 = vpack.c.bf16 %v1351, %v1349
  %v1444 = vpack.c.bf16 %v1354, %v1352
  %v1445 = vpack.c.bf16 %v1355, %v1353
  %v1446 = vpack.c.bf16 %v1358, %v1356
  %v1447 = vpack.c.bf16 %v1359, %v1357
  %v1448 = vpack.c.bf16 %v1362, %v1360
  %v1449 = vpack.c.bf16 %v1363, %v1361
  %v1450 = vpack.c.bf16 %v1366, %v1364
  %v1451 = vpack.c.bf16 %v1367, %v1365
  %v1452 = vpack.c.bf16 %v1370, %v1368
  %v1453 = vpack.c.bf16 %v1371, %v1369
  %v1454 = vpack.c.bf16 %v1374, %v1372
  %v1455 = vpack.c.bf16 %v1375, %v1373
  %v1456 = vpack.c.bf16 %v1378, %v1376
  %v1457 = vpack.c.bf16 %v1379, %v1377
  %v1458 = vpack.c.bf16 %v1382, %v1380
  %v1459 = vpack.c.bf16 %v1383, %v1381
  %v1460 = vpack.c.bf16 %v1386, %v1384
  %v1461 = vpack.c.bf16 %v1387, %v1385
  %v1462 = vpack.c.bf16 %v1390, %v1388
  %v1463 = vpack.c.bf16 %v1391, %v1389
  %v1464 = vpack.c.bf16 %v1394, %v1392
  %v1465 = vpack.c.bf16 %v1395, %v1393
  %v1466 = vpack.c.bf16 %v1398, %v1396
  %v1467 = vpack.c.bf16 %v1399, %v1397
  %v1468 = vpack.c.bf16 %v1402, %v1400
  %v1469 = vpack.c.bf16 %v1403, %v1401
  %v1470 = vpack.c.bf16 %v1406, %v1404
  %v1471 = vpack.c.bf16 %v1407, %v1405
  %v1504 = vunpack.c.l.b16 %v1408
  %v1505 = vunpack.c.h.b16 %v1408
  %v1506 = vunpack.c.l.b16 %v1409
  %v1507 = vunpack.c.h.b16 %v1409
  %v1508 = vunpack.c.l.b16 %v1410
  %v1509 = vunpack.c.h.b16 %v1410
  %v1510 = vunpack.c.l.b16 %v1411
  %v1511 = vunpack.c.h.b16 %v1411
  %v1512 = vunpack.c.l.b16 %v1412
  %v1513 = vunpack.c.h.b16 %v1412
  %v1514 = vunpack.c.l.b16 %v1413
  %v1515 = vunpack.c.h.b16 %v1413
  %v1516 = vunpack.c.l.b16 %v1414
  %v1517 = vunpack.c.h.b16 %v1414
  %v1518 = vunpack.c.l.b16 %v1415
  %v1519 = vunpack.c.h.b16 %v1415
  %v1520 = vunpack.c.l.b16 %v1416
  %v1521 = vunpack.c.h.b16 %v1416
  %v1522 = vunpack.c.l.b16 %v1417
  %v1523 = vunpack.c.h.b16 %v1417
  %v1524 = vunpack.c.l.b16 %v1418
  %v1525 = vunpack.c.h.b16 %v1418
  %v1526 = vunpack.c.l.b16 %v1419
  %v1527 = vunpack.c.h.b16 %v1419
  %v1528 = vunpack.c.l.b16 %v1420
  %v1529 = vunpack.c.h.b16 %v1420
  %v1530 = vunpack.c.l.b16 %v1421
  %v1531 = vunpack.c.h.b16 %v1421
  %v1532 = vunpack.c.l.b16 %v1422
  %v1533 = vunpack.c.h.b16 %v1422
  %v1534 = vunpack.c.l.b16 %v1423
  %v1535 = vunpack.c.h.b16 %v1423
  %v1536 = vunpack.c.l.b16 %v1424
  %v1537 = vunpack.c.h.b16 %v1424
  %v1538 = vunpack.c.l.b16 %v1425
  %v1539 = vunpack.c.h.b16 %v1425
  %v1540 = vunpack.c.l.b16 %v1426
  %v1541 = vunpack.c.h.b16 %v1426
  %v1542 = vunpack.c.l.b16 %v1427
  %v1543 = vunpack.c.h.b16 %v1427
  %v1544 = vunpack.c.l.b16 %v1428
  %v1545 = vunpack.c.h.b16 %v1428
  %v1546 = vunpack.c.l.b16 %v1429
  %v1547 = vunpack.c.h.b16 %v1429
  %v1548 = vunpack.c.l.b16 %v1430
  %v1549 = vunpack.c.h.b16 %v1430
  %v1550 = vunpack.c.l.b16 %v1431
  %v1551 = vunpack.c.h.b16 %v1431
  %v1552 = vunpack.c.l.b16 %v1432
  %v1553 = vunpack.c.h.b16 %v1432
  %v1554 = vunpack.c.l.b16 %v1433
  %v1555 = vunpack.c.h.b16 %v1433
  %v1556 = vunpack.c.l.b16 %v1434
  %v1557 = vunpack.c.h.b16 %v1434
  %v1558 = vunpack.c.l.b16 %v1435
  %v1559 = vunpack.c.h.b16 %v1435
  %v1560 = vunpack.c.l.b16 %v1436
  %v1561 = vunpack.c.h.b16 %v1436
  %v1562 = vunpack.c.l.b16 %v1437
  %v1563 = vunpack.c.h.b16 %v1437
  %v1564 = vunpack.c.l.b16 %v1438
  %v1565 = vunpack.c.h.b16 %v1438
  %v1566 = vunpack.c.l.b16 %v1439
  %v1567 = vunpack.c.h.b16 %v1439
  %v1568 = vpack.c.b16 %v1506, %v1504
  %v1569 = vpack.c.b16 %v1507, %v1505
  %v1570 = vpack.c.b16 %v1510, %v1508
  %v1571 = vpack.c.b16 %v1511, %v1509
  %v1572 = vpack.c.b16 %v1514, %v1512
  %v1573 = vpack.c.b16 %v1515, %v1513
  %v1574 = vpack.c.b16 %v1518, %v1516
  %v1575 = vpack.c.b16 %v1519, %v1517
  %v1576 = vpack.c.b16 %v1522, %v1520
  %v1577 = vpack.c.b16 %v1523, %v1521
  %v1578 = vpack.c.b16 %v1526, %v1524
  %v1579 = vpack.c.b16 %v1527, %v1525
  %v1580 = vpack.c.b16 %v1530, %v1528
  %v1581 = vpack.c.b16 %v1531, %v1529
  %v1582 = vpack.c.b16 %v1534, %v1532
  %v1583 = vpack.c.b16 %v1535, %v1533
  %v1584 = vpack.c.b16 %v1538, %v1536
  %v1585 = vpack.c.b16 %v1539, %v1537
  %v1586 = vpack.c.b16 %v1542, %v1540
  %v1587 = vpack.c.b16 %v1543, %v1541
  %v1588 = vpack.c.b16 %v1546, %v1544
  %v1589 = vpack.c.b16 %v1547, %v1545
  %v1590 = vpack.c.b16 %v1550, %v1548
  %v1591 = vpack.c.b16 %v1551, %v1549
  %v1592 = vpack.c.b16 %v1554, %v1552
  %v1593 = vpack.c.b16 %v1555, %v1553
  %v1594 = vpack.c.b16 %v1558, %v1556
  %v1595 = vpack.c.b16 %v1559, %v1557
  %v1596 = vpack.c.b16 %v1562, %v1560
  %v1597 = vpack.c.b16 %v1563, %v1561
  %v1598 = vpack.c.b16 %v1566, %v1564
  %v1599 = vpack.c.b16 %v1567, %v1565
  %1632 = vmatprep.subr.bf16.mxu0 %v1455
  %1633 = vmatpush1.bf16.msra.mxu0 %v1454
  %1634 = vmatprep.subr.bf16.mxu0 %v1453
  %1635 = vmatpush1.bf16.msra.mxu0 %v1452
  %1636 = vmatprep.subr.bf16.mxu0 %v1451
  %1637 = vmatpush1.bf16.msra.mxu0 %v1450
  %1638 = vmatprep.subr.bf16.mxu0 %v1449
  %1639 = vmatpush1.bf16.msra.mxu0 %v1448
  %1640 = vmatprep.subr.bf16.mxu0 %v1447
  %1641 = vmatpush1.bf16.msra.mxu0 %v1446
  %1642 = vmatprep.subr.bf16.mxu0 %v1445
  %1643 = vmatpush1.bf16.msra.mxu0 %v1444
  %1644 = vmatprep.subr.bf16.mxu0 %v1443
  %1645 = vmatpush1.bf16.msra.mxu0 %v1442
  %1646 = vmatprep.subr.bf16.mxu0 %v1441
  %1647 = vmatpush1.bf16.msra.mxu0 %v1440
  %1648 = vmatprep.subr.bf16.mxu0 %v1471
  %1649 = vmatpush2.bf16.msra.mxu0 %v1470
  %1650 = vmatprep.subr.bf16.mxu0 %v1469
  %1651 = vmatpush2.bf16.msra.mxu0 %v1468
  %1652 = vmatprep.subr.bf16.mxu0 %v1467
  %1653 = vmatpush2.bf16.msra.mxu0 %v1466
  %1654 = vmatprep.subr.bf16.mxu0 %v1465
  %1655 = vmatpush2.bf16.msra.mxu0 %v1464
  %1656 = vmatprep.subr.bf16.mxu0 %v1463
  %1657 = vmatpush2.bf16.msra.mxu0 %v1462
  %1658 = vmatprep.subr.bf16.mxu0 %v1461
  %1659 = vmatpush2.bf16.msra.mxu0 %v1460
  %1660 = vmatprep.subr.bf16.mxu0 %v1459
  %1661 = vmatpush2.bf16.msra.mxu0 %v1458
  %1662 = vmatprep.subr.bf16.mxu0 %v1457
  %1663 = vmatpush2.bf16.msra.mxu0 %v1456
  %1664 = vmatprep.mubr.bf16.mxu0 %v1569
  %1665 = vmatmul.mubr.bf16.gmra.mxu0 %v1568
  %v1666 = vpop.f32.mrf.mxu0
  %v1667 = vadd.f32 0.0, %v1666
  %v1668 = vpop.f32.mrf.mxu0
  %v1669 = vadd.f32 0.0, %v1668
  %v1670 = vpop.f32.mrf.mxu0
  %v1671 = vadd.f32 0.0, %v1670
  %v1672 = vpop.f32.mrf.mxu0
  %v1673 = vadd.f32 0.0, %v1672
  %1674 = vmatprep.mubr.bf16.mxu0 %v1571
  %1675 = vmatmul.mubr.bf16.gmra.mxu0 %v1570
  %v1676 = vpop.f32.mrf.mxu0
  %v1677 = vadd.f32 0.0, %v1676
  %v1678 = vpop.f32.mrf.mxu0
  %v1679 = vadd.f32 0.0, %v1678
  %v1680 = vpop.f32.mrf.mxu0
  %v1681 = vadd.f32 0.0, %v1680
  %v1682 = vpop.f32.mrf.mxu0
  %v1683 = vadd.f32 0.0, %v1682
  %1684 = vmatprep.mubr.bf16.mxu0 %v1573
  %1685 = vmatmul.mubr.bf16.gmra.mxu0 %v1572
  %v1686 = vpop.f32.mrf.mxu0
  %v1687 = vadd.f32 0.0, %v1686
  %v1688 = vpop.f32.mrf.mxu0
  %v1689 = vadd.f32 0.0, %v1688
  %v1690 = vpop.f32.mrf.mxu0
  %v1691 = vadd.f32 0.0, %v1690
  %v1692 = vpop.f32.mrf.mxu0
  %v1693 = vadd.f32 0.0, %v1692
  %1694 = vmatprep.mubr.bf16.mxu0 %v1575
  %1695 = vmatmul.mubr.bf16.gmra.mxu0 %v1574
  %v1696 = vpop.f32.mrf.mxu0
  %v1697 = vadd.f32 0.0, %v1696
  %v1698 = vpop.f32.mrf.mxu0
  %v1699 = vadd.f32 0.0, %v1698
  %v1700 = vpop.f32.mrf.mxu0
  %v1701 = vadd.f32 0.0, %v1700
  %v1702 = vpop.f32.mrf.mxu0
  %v1703 = vadd.f32 0.0, %v1702
  %1704 = vmatprep.mubr.bf16.mxu0 %v1577
  %1705 = vmatmul.mubr.bf16.gmra.mxu0 %v1576
  %v1706 = vpop.f32.mrf.mxu0
  %v1707 = vadd.f32 0.0, %v1706
  %v1708 = vpop.f32.mrf.mxu0
  %v1709 = vadd.f32 0.0, %v1708
  %v1710 = vpop.f32.mrf.mxu0
  %v1711 = vadd.f32 0.0, %v1710
  %v1712 = vpop.f32.mrf.mxu0
  %v1713 = vadd.f32 0.0, %v1712
  %1714 = vmatprep.mubr.bf16.mxu0 %v1579
  %1715 = vmatmul.mubr.bf16.gmra.mxu0 %v1578
  %v1716 = vpop.f32.mrf.mxu0
  %v1717 = vadd.f32 0.0, %v1716
  %v1718 = vpop.f32.mrf.mxu0
  %v1719 = vadd.f32 0.0, %v1718
  %v1720 = vpop.f32.mrf.mxu0
  %v1721 = vadd.f32 0.0, %v1720
  %v1722 = vpop.f32.mrf.mxu0
  %v1723 = vadd.f32 0.0, %v1722
  %1724 = vmatprep.mubr.bf16.mxu0 %v1581
  %1725 = vmatmul.mubr.bf16.gmra.mxu0 %v1580
  %v1726 = vpop.f32.mrf.mxu0
  %v1727 = vadd.f32 0.0, %v1726
  %v1728 = vpop.f32.mrf.mxu0
  %v1729 = vadd.f32 0.0, %v1728
  %v1730 = vpop.f32.mrf.mxu0
  %v1731 = vadd.f32 0.0, %v1730
  %v1732 = vpop.f32.mrf.mxu0
  %v1733 = vadd.f32 0.0, %v1732
  %1734 = vmatprep.mubr.bf16.mxu0 %v1583
  %1735 = vmatmul.mubr.bf16.gmra.mxu0 %v1582
  %v1736 = vpop.f32.mrf.mxu0
  %v1737 = vadd.f32 0.0, %v1736
  %v1738 = vpop.f32.mrf.mxu0
  %v1739 = vadd.f32 0.0, %v1738
  %v1740 = vpop.f32.mrf.mxu0
  %v1741 = vadd.f32 0.0, %v1740
  %v1742 = vpop.f32.mrf.mxu0
  %v1743 = vadd.f32 0.0, %v1742
  %1744 = vmatprep.mubr.bf16.mxu0 %v1585
  %1745 = vmatmul.mubr.bf16.gmra.mxu0 %v1584
  %v1746 = vpop.f32.mrf.mxu0
  %v1747 = vadd.f32 0.0, %v1746
  %v1748 = vpop.f32.mrf.mxu0
  %v1749 = vadd.f32 0.0, %v1748
  %v1750 = vpop.f32.mrf.mxu0
  %v1751 = vadd.f32 0.0, %v1750
  %v1752 = vpop.f32.mrf.mxu0
  %v1753 = vadd.f32 0.0, %v1752
  %1754 = vmatprep.mubr.bf16.mxu0 %v1587
  %1755 = vmatmul.mubr.bf16.gmra.mxu0 %v1586
  %v1756 = vpop.f32.mrf.mxu0
  %v1757 = vadd.f32 0.0, %v1756
  %v1758 = vpop.f32.mrf.mxu0
  %v1759 = vadd.f32 0.0, %v1758
  %v1760 = vpop.f32.mrf.mxu0
  %v1761 = vadd.f32 0.0, %v1760
  %v1762 = vpop.f32.mrf.mxu0
  %v1763 = vadd.f32 0.0, %v1762
  %1764 = vmatprep.mubr.bf16.mxu0 %v1589
  %1765 = vmatmul.mubr.bf16.gmra.mxu0 %v1588
  %v1766 = vpop.f32.mrf.mxu0
  %v1767 = vadd.f32 0.0, %v1766
  %v1768 = vpop.f32.mrf.mxu0
  %v1769 = vadd.f32 0.0, %v1768
  %v1770 = vpop.f32.mrf.mxu0
  %v1771 = vadd.f32 0.0, %v1770
  %v1772 = vpop.f32.mrf.mxu0
  %v1773 = vadd.f32 0.0, %v1772
  %1774 = vmatprep.mubr.bf16.mxu0 %v1591
  %1775 = vmatmul.mubr.bf16.gmra.mxu0 %v1590
  %v1776 = vpop.f32.mrf.mxu0
  %v1777 = vadd.f32 0.0, %v1776
  %v1778 = vpop.f32.mrf.mxu0
  %v1779 = vadd.f32 0.0, %v1778
  %v1780 = vpop.f32.mrf.mxu0
  %v1781 = vadd.f32 0.0, %v1780
  %v1782 = vpop.f32.mrf.mxu0
  %v1783 = vadd.f32 0.0, %v1782
  %1784 = vmatprep.mubr.bf16.mxu0 %v1593
  %1785 = vmatmul.mubr.bf16.gmra.mxu0 %v1592
  %v1786 = vpop.f32.mrf.mxu0
  %v1787 = vadd.f32 0.0, %v1786
  %v1788 = vpop.f32.mrf.mxu0
  %v1789 = vadd.f32 0.0, %v1788
  %v1790 = vpop.f32.mrf.mxu0
  %v1791 = vadd.f32 0.0, %v1790
  %v1792 = vpop.f32.mrf.mxu0
  %v1793 = vadd.f32 0.0, %v1792
  %1794 = vmatprep.mubr.bf16.mxu0 %v1595
  %1795 = vmatmul.mubr.bf16.gmra.mxu0 %v1594
  %v1796 = vpop.f32.mrf.mxu0
  %v1797 = vadd.f32 0.0, %v1796
  %v1798 = vpop.f32.mrf.mxu0
  %v1799 = vadd.f32 0.0, %v1798
  %v1800 = vpop.f32.mrf.mxu0
  %v1801 = vadd.f32 0.0, %v1800
  %v1802 = vpop.f32.mrf.mxu0
  %v1803 = vadd.f32 0.0, %v1802
  %1804 = vmatprep.mubr.bf16.mxu0 %v1597
  %1805 = vmatmul.mubr.bf16.gmra.mxu0 %v1596
  %v1806 = vpop.f32.mrf.mxu0
  %v1807 = vadd.f32 0.0, %v1806
  %v1808 = vpop.f32.mrf.mxu0
  %v1809 = vadd.f32 0.0, %v1808
  %v1810 = vpop.f32.mrf.mxu0
  %v1811 = vadd.f32 0.0, %v1810
  %v1812 = vpop.f32.mrf.mxu0
  %v1813 = vadd.f32 0.0, %v1812
  %1814 = vmatprep.mubr.bf16.mxu0 %v1599
  %1815 = vmatmul.mubr.bf16.gmra.mxu0 %v1598
  %v1816 = vpop.f32.mrf.mxu0
  %v1817 = vadd.f32 0.0, %v1816
  %v1818 = vpop.f32.mrf.mxu0
  %v1819 = vadd.f32 0.0, %v1818
  %v1820 = vpop.f32.mrf.mxu0
  %v1821 = vadd.f32 0.0, %v1820
  %v1822 = vpop.f32.mrf.mxu0
  %v1823 = vadd.f32 0.0, %v1822
  %1824 = vdwg.mxu0
  %v1857 = vunpack.c.l.b16 %v735
  %v1858 = vunpack.c.h.b16 %v735
  %v1859 = vunpack.c.l.b16 %v736
  %v1860 = vunpack.c.h.b16 %v736
  %v1861 = vunpack.c.l.b16 %v737
  %v1862 = vunpack.c.h.b16 %v737
  %v1863 = vunpack.c.l.b16 %v738
  %v1864 = vunpack.c.h.b16 %v738
  %v1865 = vunpack.c.l.b16 %v739
  %v1866 = vunpack.c.h.b16 %v739
  %v1867 = vunpack.c.l.b16 %v740
  %v1868 = vunpack.c.h.b16 %v740
  %v1869 = vunpack.c.l.b16 %v741
  %v1870 = vunpack.c.h.b16 %v741
  %v1871 = vunpack.c.l.b16 %v742
  %v1872 = vunpack.c.h.b16 %v742
  %v1873 = vunpack.c.l.b16 %v743
  %v1874 = vunpack.c.h.b16 %v743
  %v1875 = vunpack.c.l.b16 %v744
  %v1876 = vunpack.c.h.b16 %v744
  %v1877 = vunpack.c.l.b16 %v745
  %v1878 = vunpack.c.h.b16 %v745
  %v1879 = vunpack.c.l.b16 %v746
  %v1880 = vunpack.c.h.b16 %v746
  %v1881 = vunpack.c.l.b16 %v747
  %v1882 = vunpack.c.h.b16 %v747
  %v1883 = vunpack.c.l.b16 %v748
  %v1884 = vunpack.c.h.b16 %v748
  %v1885 = vunpack.c.l.b16 %v749
  %v1886 = vunpack.c.h.b16 %v749
  %v1887 = vunpack.c.l.b16 %v750
  %v1888 = vunpack.c.h.b16 %v750
  %v1889 = vunpack.c.l.b16 %v751
  %v1890 = vunpack.c.h.b16 %v751
  %v1891 = vunpack.c.l.b16 %v752
  %v1892 = vunpack.c.h.b16 %v752
  %v1893 = vunpack.c.l.b16 %v753
  %v1894 = vunpack.c.h.b16 %v753
  %v1895 = vunpack.c.l.b16 %v754
  %v1896 = vunpack.c.h.b16 %v754
  %v1897 = vunpack.c.l.b16 %v755
  %v1898 = vunpack.c.h.b16 %v755
  %v1899 = vunpack.c.l.b16 %v756
  %v1900 = vunpack.c.h.b16 %v756
  %v1901 = vunpack.c.l.b16 %v757
  %v1902 = vunpack.c.h.b16 %v757
  %v1903 = vunpack.c.l.b16 %v758
  %v1904 = vunpack.c.h.b16 %v758
  %v1905 = vunpack.c.l.b16 %v759
  %v1906 = vunpack.c.h.b16 %v759
  %v1907 = vunpack.c.l.b16 %v760
  %v1908 = vunpack.c.h.b16 %v760
  %v1909 = vunpack.c.l.b16 %v761
  %v1910 = vunpack.c.h.b16 %v761
  %v1911 = vunpack.c.l.b16 %v762
  %v1912 = vunpack.c.h.b16 %v762
  %v1913 = vunpack.c.l.b16 %v763
  %v1914 = vunpack.c.h.b16 %v763
  %v1915 = vunpack.c.l.b16 %v764
  %v1916 = vunpack.c.h.b16 %v764
  %v1917 = vunpack.c.l.b16 %v765
  %v1918 = vunpack.c.h.b16 %v765
  %v1919 = vunpack.c.l.b16 %v766
  %v1920 = vunpack.c.h.b16 %v766
  %v1921 = vpack.c.b16 %v1859, %v1857
  %v1922 = vpack.c.b16 %v1860, %v1858
  %v1923 = vpack.c.b16 %v1863, %v1861
  %v1924 = vpack.c.b16 %v1864, %v1862
  %v1925 = vpack.c.b16 %v1867, %v1865
  %v1926 = vpack.c.b16 %v1868, %v1866
  %v1927 = vpack.c.b16 %v1871, %v1869
  %v1928 = vpack.c.b16 %v1872, %v1870
  %v1929 = vpack.c.b16 %v1875, %v1873
  %v1930 = vpack.c.b16 %v1876, %v1874
  %v1931 = vpack.c.b16 %v1879, %v1877
  %v1932 = vpack.c.b16 %v1880, %v1878
  %v1933 = vpack.c.b16 %v1883, %v1881
  %v1934 = vpack.c.b16 %v1884, %v1882
  %v1935 = vpack.c.b16 %v1887, %v1885
  %v1936 = vpack.c.b16 %v1888, %v1886
  %v1937 = vpack.c.b16 %v1891, %v1889
  %v1938 = vpack.c.b16 %v1892, %v1890
  %v1939 = vpack.c.b16 %v1895, %v1893
  %v1940 = vpack.c.b16 %v1896, %v1894
  %v1941 = vpack.c.b16 %v1899, %v1897
  %v1942 = vpack.c.b16 %v1900, %v1898
  %v1943 = vpack.c.b16 %v1903, %v1901
  %v1944 = vpack.c.b16 %v1904, %v1902
  %v1945 = vpack.c.b16 %v1907, %v1905
  %v1946 = vpack.c.b16 %v1908, %v1906
  %v1947 = vpack.c.b16 %v1911, %v1909
  %v1948 = vpack.c.b16 %v1912, %v1910
  %v1949 = vpack.c.b16 %v1915, %v1913
  %v1950 = vpack.c.b16 %v1916, %v1914
  %v1951 = vpack.c.b16 %v1919, %v1917
  %v1952 = vpack.c.b16 %v1920, %v1918
  %1985 = vmatprep.subr.bf16.mxu0 %v782
  %1986 = vmatpush1.bf16.msra.mxu0 %v781
  %1987 = vmatprep.subr.bf16.mxu0 %v780
  %1988 = vmatpush1.bf16.msra.mxu0 %v779
  %1989 = vmatprep.subr.bf16.mxu0 %v778
  %1990 = vmatpush1.bf16.msra.mxu0 %v777
  %1991 = vmatprep.subr.bf16.mxu0 %v776
  %1992 = vmatpush1.bf16.msra.mxu0 %v775
  %1993 = vmatprep.subr.bf16.mxu0 %v774
  %1994 = vmatpush1.bf16.msra.mxu0 %v773
  %1995 = vmatprep.subr.bf16.mxu0 %v772
  %1996 = vmatpush1.bf16.msra.mxu0 %v771
  %1997 = vmatprep.subr.bf16.mxu0 %v770
  %1998 = vmatpush1.bf16.msra.mxu0 %v769
  %1999 = vmatprep.subr.bf16.mxu0 %v768
  %2000 = vmatpush1.bf16.msra.mxu0 %v767
  %2001 = vmatprep.subr.bf16.mxu0 %v798
  %2002 = vmatpush2.bf16.msra.mxu0 %v797
  %2003 = vmatprep.subr.bf16.mxu0 %v796
  %2004 = vmatpush2.bf16.msra.mxu0 %v795
  %2005 = vmatprep.subr.bf16.mxu0 %v794
  %2006 = vmatpush2.bf16.msra.mxu0 %v793
  %2007 = vmatprep.subr.bf16.mxu0 %v792
  %2008 = vmatpush2.bf16.msra.mxu0 %v791
  %2009 = vmatprep.subr.bf16.mxu0 %v790
  %2010 = vmatpush2.bf16.msra.mxu0 %v789
  %2011 = vmatprep.subr.bf16.mxu0 %v788
  %2012 = vmatpush2.bf16.msra.mxu0 %v787
  %2013 = vmatprep.subr.bf16.mxu0 %v786
  %2014 = vmatpush2.bf16.msra.mxu0 %v785
  %2015 = vmatprep.subr.bf16.mxu0 %v784
  %2016 = vmatpush2.bf16.msra.mxu0 %v783
  %2017 = vmatprep.mubr.bf16.mxu0 %v1922
  %2018 = vmatmul.mubr.bf16.gmra.mxu0 %v1921
  %v2019 = vpop.f32.mrf.mxu0
  %v2020 = vadd.f32 %v1667, %v2019
  %v2021 = vpop.f32.mrf.mxu0
  %v2022 = vadd.f32 %v1669, %v2021
  %v2023 = vpop.f32.mrf.mxu0
  %v2024 = vadd.f32 %v1671, %v2023
  %v2025 = vpop.f32.mrf.mxu0
  %v2026 = vadd.f32 %v1673, %v2025
  %2027 = vmatprep.mubr.bf16.mxu0 %v1924
  %2028 = vmatmul.mubr.bf16.gmra.mxu0 %v1923
  %v2029 = vpop.f32.mrf.mxu0
  %v2030 = vadd.f32 %v1677, %v2029
  %v2031 = vpop.f32.mrf.mxu0
  %v2032 = vadd.f32 %v1679, %v2031
  %v2033 = vpop.f32.mrf.mxu0
  %v2034 = vadd.f32 %v1681, %v2033
  %v2035 = vpop.f32.mrf.mxu0
  %v2036 = vadd.f32 %v1683, %v2035
  %2037 = vmatprep.mubr.bf16.mxu0 %v1926
  %2038 = vmatmul.mubr.bf16.gmra.mxu0 %v1925
  %v2039 = vpop.f32.mrf.mxu0
  %v2040 = vadd.f32 %v1687, %v2039
  %v2041 = vpop.f32.mrf.mxu0
  %v2042 = vadd.f32 %v1689, %v2041
  %v2043 = vpop.f32.mrf.mxu0
  %v2044 = vadd.f32 %v1691, %v2043
  %v2045 = vpop.f32.mrf.mxu0
  %v2046 = vadd.f32 %v1693, %v2045
  %2047 = vmatprep.mubr.bf16.mxu0 %v1928
  %2048 = vmatmul.mubr.bf16.gmra.mxu0 %v1927
  %v2049 = vpop.f32.mrf.mxu0
  %v2050 = vadd.f32 %v1697, %v2049
  %v2051 = vpop.f32.mrf.mxu0
  %v2052 = vadd.f32 %v1699, %v2051
  %v2053 = vpop.f32.mrf.mxu0
  %v2054 = vadd.f32 %v1701, %v2053
  %v2055 = vpop.f32.mrf.mxu0
  %v2056 = vadd.f32 %v1703, %v2055
  %2057 = vmatprep.mubr.bf16.mxu0 %v1930
  %2058 = vmatmul.mubr.bf16.gmra.mxu0 %v1929
  %v2059 = vpop.f32.mrf.mxu0
  %v2060 = vadd.f32 %v1707, %v2059
  %v2061 = vpop.f32.mrf.mxu0
  %v2062 = vadd.f32 %v1709, %v2061
  %v2063 = vpop.f32.mrf.mxu0
  %v2064 = vadd.f32 %v1711, %v2063
  %v2065 = vpop.f32.mrf.mxu0
  %v2066 = vadd.f32 %v1713, %v2065
  %2067 = vmatprep.mubr.bf16.mxu0 %v1932
  %2068 = vmatmul.mubr.bf16.gmra.mxu0 %v1931
  %v2069 = vpop.f32.mrf.mxu0
  %v2070 = vadd.f32 %v1717, %v2069
  %v2071 = vpop.f32.mrf.mxu0
  %v2072 = vadd.f32 %v1719, %v2071
  %v2073 = vpop.f32.mrf.mxu0
  %v2074 = vadd.f32 %v1721, %v2073
  %v2075 = vpop.f32.mrf.mxu0
  %v2076 = vadd.f32 %v1723, %v2075
  %2077 = vmatprep.mubr.bf16.mxu0 %v1934
  %2078 = vmatmul.mubr.bf16.gmra.mxu0 %v1933
  %v2079 = vpop.f32.mrf.mxu0
  %v2080 = vadd.f32 %v1727, %v2079
  %v2081 = vpop.f32.mrf.mxu0
  %v2082 = vadd.f32 %v1729, %v2081
  %v2083 = vpop.f32.mrf.mxu0
  %v2084 = vadd.f32 %v1731, %v2083
  %v2085 = vpop.f32.mrf.mxu0
  %v2086 = vadd.f32 %v1733, %v2085
  %2087 = vmatprep.mubr.bf16.mxu0 %v1936
  %2088 = vmatmul.mubr.bf16.gmra.mxu0 %v1935
  %v2089 = vpop.f32.mrf.mxu0
  %v2090 = vadd.f32 %v1737, %v2089
  %v2091 = vpop.f32.mrf.mxu0
  %v2092 = vadd.f32 %v1739, %v2091
  %v2093 = vpop.f32.mrf.mxu0
  %v2094 = vadd.f32 %v1741, %v2093
  %v2095 = vpop.f32.mrf.mxu0
  %v2096 = vadd.f32 %v1743, %v2095
  %2097 = vmatprep.mubr.bf16.mxu0 %v1938
  %2098 = vmatmul.mubr.bf16.gmra.mxu0 %v1937
  %v2099 = vpop.f32.mrf.mxu0
  %v2100 = vadd.f32 %v1747, %v2099
  %v2101 = vpop.f32.mrf.mxu0
  %v2102 = vadd.f32 %v1749, %v2101
  %v2103 = vpop.f32.mrf.mxu0
  %v2104 = vadd.f32 %v1751, %v2103
  %v2105 = vpop.f32.mrf.mxu0
  %v2106 = vadd.f32 %v1753, %v2105
  %2107 = vmatprep.mubr.bf16.mxu0 %v1940
  %2108 = vmatmul.mubr.bf16.gmra.mxu0 %v1939
  %v2109 = vpop.f32.mrf.mxu0
  %v2110 = vadd.f32 %v1757, %v2109
  %v2111 = vpop.f32.mrf.mxu0
  %v2112 = vadd.f32 %v1759, %v2111
  %v2113 = vpop.f32.mrf.mxu0
  %v2114 = vadd.f32 %v1761, %v2113
  %v2115 = vpop.f32.mrf.mxu0
  %v2116 = vadd.f32 %v1763, %v2115
  %2117 = vmatprep.mubr.bf16.mxu0 %v1942
  %2118 = vmatmul.mubr.bf16.gmra.mxu0 %v1941
  %v2119 = vpop.f32.mrf.mxu0
  %v2120 = vadd.f32 %v1767, %v2119
  %v2121 = vpop.f32.mrf.mxu0
  %v2122 = vadd.f32 %v1769, %v2121
  %v2123 = vpop.f32.mrf.mxu0
  %v2124 = vadd.f32 %v1771, %v2123
  %v2125 = vpop.f32.mrf.mxu0
  %v2126 = vadd.f32 %v1773, %v2125
  %2127 = vmatprep.mubr.bf16.mxu0 %v1944
  %2128 = vmatmul.mubr.bf16.gmra.mxu0 %v1943
  %v2129 = vpop.f32.mrf.mxu0
  %v2130 = vadd.f32 %v1777, %v2129
  %v2131 = vpop.f32.mrf.mxu0
  %v2132 = vadd.f32 %v1779, %v2131
  %v2133 = vpop.f32.mrf.mxu0
  %v2134 = vadd.f32 %v1781, %v2133
  %v2135 = vpop.f32.mrf.mxu0
  %v2136 = vadd.f32 %v1783, %v2135
  %2137 = vmatprep.mubr.bf16.mxu0 %v1946
  %2138 = vmatmul.mubr.bf16.gmra.mxu0 %v1945
  %v2139 = vpop.f32.mrf.mxu0
  %v2140 = vadd.f32 %v1787, %v2139
  %v2141 = vpop.f32.mrf.mxu0
  %v2142 = vadd.f32 %v1789, %v2141
  %v2143 = vpop.f32.mrf.mxu0
  %v2144 = vadd.f32 %v1791, %v2143
  %v2145 = vpop.f32.mrf.mxu0
  %v2146 = vadd.f32 %v1793, %v2145
  %2147 = vmatprep.mubr.bf16.mxu0 %v1948
  %2148 = vmatmul.mubr.bf16.gmra.mxu0 %v1947
  %v2149 = vpop.f32.mrf.mxu0
  %v2150 = vadd.f32 %v1797, %v2149
  %v2151 = vpop.f32.mrf.mxu0
  %v2152 = vadd.f32 %v1799, %v2151
  %v2153 = vpop.f32.mrf.mxu0
  %v2154 = vadd.f32 %v1801, %v2153
  %v2155 = vpop.f32.mrf.mxu0
  %v2156 = vadd.f32 %v1803, %v2155
  %2157 = vmatprep.mubr.bf16.mxu0 %v1950
  %2158 = vmatmul.mubr.bf16.gmra.mxu0 %v1949
  %v2159 = vpop.f32.mrf.mxu0
  %v2160 = vadd.f32 %v1807, %v2159
  %v2161 = vpop.f32.mrf.mxu0
  %v2162 = vadd.f32 %v1809, %v2161
  %v2163 = vpop.f32.mrf.mxu0
  %v2164 = vadd.f32 %v1811, %v2163
  %v2165 = vpop.f32.mrf.mxu0
  %v2166 = vadd.f32 %v1813, %v2165
  %2167 = vmatprep.mubr.bf16.mxu0 %v1952
  %2168 = vmatmul.mubr.bf16.gmra.mxu0 %v1951
  %v2169 = vpop.f32.mrf.mxu0
  %v2170 = vadd.f32 %v1817, %v2169
  %v2171 = vpop.f32.mrf.mxu0
  %v2172 = vadd.f32 %v1819, %v2171
  %v2173 = vpop.f32.mrf.mxu0
  %v2174 = vadd.f32 %v1821, %v2173
  %v2175 = vpop.f32.mrf.mxu0
  %v2176 = vadd.f32 %v1823, %v2175
  %2177 = vdwg.mxu0
  %v2178 = vld [vmem:[%s4] sm:$0xff]
  %v2179 = vld [vmem:[%s4 + $0x8] sm:$0xff]
  %v2180 = vld [vmem:[%s4 + $0x10] sm:$0xff]
  %v2181 = vld [vmem:[%s4 + $0x18] sm:$0xff]
  %v2182 = vld [vmem:[%s4 + $0x20] sm:$0xff]
  %v2183 = vld [vmem:[%s4 + $0x28] sm:$0xff]
  %v2184 = vld [vmem:[%s4 + $0x30] sm:$0xff]
  %v2185 = vld [vmem:[%s4 + $0x38] sm:$0xff]
  %v2186 = vld [vmem:[%s4 + $0x40] sm:$0xff]
  %v2187 = vld [vmem:[%s4 + $0x48] sm:$0xff]
  %v2188 = vld [vmem:[%s4 + $0x50] sm:$0xff]
  %v2189 = vld [vmem:[%s4 + $0x58] sm:$0xff]
  %v2190 = vld [vmem:[%s4 + $0x60] sm:$0xff]
  %v2191 = vld [vmem:[%s4 + $0x68] sm:$0xff]
  %v2192 = vld [vmem:[%s4 + $0x70] sm:$0xff]
  %v2193 = vld [vmem:[%s4 + $0x78] sm:$0xff]
  %v2194 = vld [vmem:[%s4 + $0x80] sm:$0xff]
  %v2195 = vld [vmem:[%s4 + $0x88] sm:$0xff]
  %v2196 = vld [vmem:[%s4 + $0x90] sm:$0xff]
  %v2197 = vld [vmem:[%s4 + $0x98] sm:$0xff]
  %v2198 = vld [vmem:[%s4 + $0xa0] sm:$0xff]
  %v2199 = vld [vmem:[%s4 + $0xa8] sm:$0xff]
  %v2200 = vld [vmem:[%s4 + $0xb0] sm:$0xff]
  %v2201 = vld [vmem:[%s4 + $0xb8] sm:$0xff]
  %v2202 = vld [vmem:[%s4 + $0xc0] sm:$0xff]
  %v2203 = vld [vmem:[%s4 + $0xc8] sm:$0xff]
  %v2204 = vld [vmem:[%s4 + $0xd0] sm:$0xff]
  %v2205 = vld [vmem:[%s4 + $0xd8] sm:$0xff]
  %v2206 = vld [vmem:[%s4 + $0xe0] sm:$0xff]
  %v2207 = vld [vmem:[%s4 + $0xe8] sm:$0xff]
  %v2208 = vld [vmem:[%s4 + $0xf0] sm:$0xff]
  %v2209 = vld [vmem:[%s4 + $0xf8] sm:$0xff]
  %2211 = vset.pattern.permute.xlu0 0
  %2212 = vperm.xlu0 %2211, %v2178
  %v2213 = vpop.permute.xlu0 %2212
  %2216 = vset.pattern.permute.xlu0 0
  %2217 = vperm.xlu0 %2216, %v2179
  %v2218 = vpop.permute.xlu0 %2217
  %2221 = vset.pattern.permute.xlu0 0
  %2222 = vperm.xlu0 %2221, %v2180
  %v2223 = vpop.permute.xlu0 %2222
  %2226 = vset.pattern.permute.xlu0 0
  %2227 = vperm.xlu0 %2226, %v2181
  %v2228 = vpop.permute.xlu0 %2227
  %2231 = vset.pattern.permute.xlu0 0
  %2232 = vperm.xlu0 %2231, %v2182
  %v2233 = vpop.permute.xlu0 %2232
  %2236 = vset.pattern.permute.xlu0 0
  %2237 = vperm.xlu0 %2236, %v2183
  %v2238 = vpop.permute.xlu0 %2237
  %2241 = vset.pattern.permute.xlu0 0
  %2242 = vperm.xlu0 %2241, %v2184
  %v2243 = vpop.permute.xlu0 %2242
  %2246 = vset.pattern.permute.xlu0 0
  %2247 = vperm.xlu0 %2246, %v2185
  %v2248 = vpop.permute.xlu0 %2247
  %2251 = vset.pattern.permute.xlu0 0
  %2252 = vperm.xlu0 %2251, %v2186
  %v2253 = vpop.permute.xlu0 %2252
  %2256 = vset.pattern.permute.xlu0 0
  %2257 = vperm.xlu0 %2256, %v2187
  %v2258 = vpop.permute.xlu0 %2257
  %2261 = vset.pattern.permute.xlu0 0
  %2262 = vperm.xlu0 %2261, %v2188
  %v2263 = vpop.permute.xlu0 %2262
  %2266 = vset.pattern.permute.xlu0 0
  %2267 = vperm.xlu0 %2266, %v2189
  %v2268 = vpop.permute.xlu0 %2267
  %2271 = vset.pattern.permute.xlu0 0
  %2272 = vperm.xlu0 %2271, %v2190
  %v2273 = vpop.permute.xlu0 %2272
  %2276 = vset.pattern.permute.xlu0 0
  %2277 = vperm.xlu0 %2276, %v2191
  %v2278 = vpop.permute.xlu0 %2277
  %2281 = vset.pattern.permute.xlu0 0
  %2282 = vperm.xlu0 %2281, %v2192
  %v2283 = vpop.permute.xlu0 %2282
  %2286 = vset.pattern.permute.xlu0 0
  %2287 = vperm.xlu0 %2286, %v2193
  %v2288 = vpop.permute.xlu0 %2287
  %2291 = vset.pattern.permute.xlu0 0
  %2292 = vperm.xlu0 %2291, %v2194
  %v2293 = vpop.permute.xlu0 %2292
  %2296 = vset.pattern.permute.xlu0 0
  %2297 = vperm.xlu0 %2296, %v2195
  %v2298 = vpop.permute.xlu0 %2297
  %2301 = vset.pattern.permute.xlu0 0
  %2302 = vperm.xlu0 %2301, %v2196
  %v2303 = vpop.permute.xlu0 %2302
  %2306 = vset.pattern.permute.xlu0 0
  %2307 = vperm.xlu0 %2306, %v2197
  %v2308 = vpop.permute.xlu0 %2307
  %2311 = vset.pattern.permute.xlu0 0
  %2312 = vperm.xlu0 %2311, %v2198
  %v2313 = vpop.permute.xlu0 %2312
  %2316 = vset.pattern.permute.xlu0 0
  %2317 = vperm.xlu0 %2316, %v2199
  %v2318 = vpop.permute.xlu0 %2317
  %2321 = vset.pattern.permute.xlu0 0
  %2322 = vperm.xlu0 %2321, %v2200
  %v2323 = vpop.permute.xlu0 %2322
  %2326 = vset.pattern.permute.xlu0 0
  %2327 = vperm.xlu0 %2326, %v2201
  %v2328 = vpop.permute.xlu0 %2327
  %2331 = vset.pattern.permute.xlu0 0
  %2332 = vperm.xlu0 %2331, %v2202
  %v2333 = vpop.permute.xlu0 %2332
  %2336 = vset.pattern.permute.xlu0 0
  %2337 = vperm.xlu0 %2336, %v2203
  %v2338 = vpop.permute.xlu0 %2337
  %2341 = vset.pattern.permute.xlu0 0
  %2342 = vperm.xlu0 %2341, %v2204
  %v2343 = vpop.permute.xlu0 %2342
  %2346 = vset.pattern.permute.xlu0 0
  %2347 = vperm.xlu0 %2346, %v2205
  %v2348 = vpop.permute.xlu0 %2347
  %2351 = vset.pattern.permute.xlu0 0
  %2352 = vperm.xlu0 %2351, %v2206
  %v2353 = vpop.permute.xlu0 %2352
  %2356 = vset.pattern.permute.xlu0 0
  %2357 = vperm.xlu0 %2356, %v2207
  %v2358 = vpop.permute.xlu0 %2357
  %2361 = vset.pattern.permute.xlu0 0
  %2362 = vperm.xlu0 %2361, %v2208
  %v2363 = vpop.permute.xlu0 %2362
  %2366 = vset.pattern.permute.xlu0 0
  %2367 = vperm.xlu0 %2366, %v2209
  %v2368 = vpop.permute.xlu0 %2367
  %v2370 = vadd.f32 %v2020, %v2213
  %v2371 = vadd.f32 %v2022, %v2213
  %v2372 = vadd.f32 %v2024, %v2218
  %v2373 = vadd.f32 %v2026, %v2218
  %v2374 = vadd.f32 %v2030, %v2223
  %v2375 = vadd.f32 %v2032, %v2223
  %v2376 = vadd.f32 %v2034, %v2228
  %v2377 = vadd.f32 %v2036, %v2228
  %v2378 = vadd.f32 %v2040, %v2233
  %v2379 = vadd.f32 %v2042, %v2233
  %v2380 = vadd.f32 %v2044, %v2238
  %v2381 = vadd.f32 %v2046, %v2238
  %v2382 = vadd.f32 %v2050, %v2243
  %v2383 = vadd.f32 %v2052, %v2243
  %v2384 = vadd.f32 %v2054, %v2248
  %v2385 = vadd.f32 %v2056, %v2248
  %v2386 = vadd.f32 %v2060, %v2253
  %v2387 = vadd.f32 %v2062, %v2253
  %v2388 = vadd.f32 %v2064, %v2258
  %v2389 = vadd.f32 %v2066, %v2258
  %v2390 = vadd.f32 %v2070, %v2263
  %v2391 = vadd.f32 %v2072, %v2263
  %v2392 = vadd.f32 %v2074, %v2268
  %v2393 = vadd.f32 %v2076, %v2268
  %v2394 = vadd.f32 %v2080, %v2273
  %v2395 = vadd.f32 %v2082, %v2273
  %v2396 = vadd.f32 %v2084, %v2278
  %v2397 = vadd.f32 %v2086, %v2278
  %v2398 = vadd.f32 %v2090, %v2283
  %v2399 = vadd.f32 %v2092, %v2283
  %v2400 = vadd.f32 %v2094, %v2288
  %v2401 = vadd.f32 %v2096, %v2288
  %v2402 = vadd.f32 %v2100, %v2293
  %v2403 = vadd.f32 %v2102, %v2293
  %v2404 = vadd.f32 %v2104, %v2298
  %v2405 = vadd.f32 %v2106, %v2298
  %v2406 = vadd.f32 %v2110, %v2303
  %v2407 = vadd.f32 %v2112, %v2303
  %v2408 = vadd.f32 %v2114, %v2308
  %v2409 = vadd.f32 %v2116, %v2308
  %v2410 = vadd.f32 %v2120, %v2313
  %v2411 = vadd.f32 %v2122, %v2313
  %v2412 = vadd.f32 %v2124, %v2318
  %v2413 = vadd.f32 %v2126, %v2318
  %v2414 = vadd.f32 %v2130, %v2323
  %v2415 = vadd.f32 %v2132, %v2323
  %v2416 = vadd.f32 %v2134, %v2328
  %v2417 = vadd.f32 %v2136, %v2328
  %v2418 = vadd.f32 %v2140, %v2333
  %v2419 = vadd.f32 %v2142, %v2333
  %v2420 = vadd.f32 %v2144, %v2338
  %v2421 = vadd.f32 %v2146, %v2338
  %v2422 = vadd.f32 %v2150, %v2343
  %v2423 = vadd.f32 %v2152, %v2343
  %v2424 = vadd.f32 %v2154, %v2348
  %v2425 = vadd.f32 %v2156, %v2348
  %v2426 = vadd.f32 %v2160, %v2353
  %v2427 = vadd.f32 %v2162, %v2353
  %v2428 = vadd.f32 %v2164, %v2358
  %v2429 = vadd.f32 %v2166, %v2358
  %v2430 = vadd.f32 %v2170, %v2363
  %v2431 = vadd.f32 %v2172, %v2363
  %v2432 = vadd.f32 %v2174, %v2368
  %v2433 = vadd.f32 %v2176, %v2368
  %v2434 = vmax.f32 %v2370, 0.0
  %v2435 = vmax.f32 %v2371, 0.0
  %v2436 = vmax.f32 %v2372, 0.0
  %v2437 = vmax.f32 %v2373, 0.0
  %v2438 = vmax.f32 %v2374, 0.0
  %v2439 = vmax.f32 %v2375, 0.0
  %v2440 = vmax.f32 %v2376, 0.0
  %v2441 = vmax.f32 %v2377, 0.0
  %v2442 = vmax.f32 %v2378, 0.0
  %v2443 = vmax.f32 %v2379, 0.0
  %v2444 = vmax.f32 %v2380, 0.0
  %v2445 = vmax.f32 %v2381, 0.0
  %v2446 = vmax.f32 %v2382, 0.0
  %v2447 = vmax.f32 %v2383, 0.0
  %v2448 = vmax.f32 %v2384, 0.0
  %v2449 = vmax.f32 %v2385, 0.0
  %v2450 = vmax.f32 %v2386, 0.0
  %v2451 = vmax.f32 %v2387, 0.0
  %v2452 = vmax.f32 %v2388, 0.0
  %v2453 = vmax.f32 %v2389, 0.0
  %v2454 = vmax.f32 %v2390, 0.0
  %v2455 = vmax.f32 %v2391, 0.0
  %v2456 = vmax.f32 %v2392, 0.0
  %v2457 = vmax.f32 %v2393, 0.0
  %v2458 = vmax.f32 %v2394, 0.0
  %v2459 = vmax.f32 %v2395, 0.0
  %v2460 = vmax.f32 %v2396, 0.0
  %v2461 = vmax.f32 %v2397, 0.0
  %v2462 = vmax.f32 %v2398, 0.0
  %v2463 = vmax.f32 %v2399, 0.0
  %v2464 = vmax.f32 %v2400, 0.0
  %v2465 = vmax.f32 %v2401, 0.0
  %v2466 = vmax.f32 %v2402, 0.0
  %v2467 = vmax.f32 %v2403, 0.0
  %v2468 = vmax.f32 %v2404, 0.0
  %v2469 = vmax.f32 %v2405, 0.0
  %v2470 = vmax.f32 %v2406, 0.0
  %v2471 = vmax.f32 %v2407, 0.0
  %v2472 = vmax.f32 %v2408, 0.0
  %v2473 = vmax.f32 %v2409, 0.0
  %v2474 = vmax.f32 %v2410, 0.0
  %v2475 = vmax.f32 %v2411, 0.0
  %v2476 = vmax.f32 %v2412, 0.0
  %v2477 = vmax.f32 %v2413, 0.0
  %v2478 = vmax.f32 %v2414, 0.0
  %v2479 = vmax.f32 %v2415, 0.0
  %v2480 = vmax.f32 %v2416, 0.0
  %v2481 = vmax.f32 %v2417, 0.0
  %v2482 = vmax.f32 %v2418, 0.0
  %v2483 = vmax.f32 %v2419, 0.0
  %v2484 = vmax.f32 %v2420, 0.0
  %v2485 = vmax.f32 %v2421, 0.0
  %v2486 = vmax.f32 %v2422, 0.0
  %v2487 = vmax.f32 %v2423, 0.0
  %v2488 = vmax.f32 %v2424, 0.0
  %v2489 = vmax.f32 %v2425, 0.0
  %v2490 = vmax.f32 %v2426, 0.0
  %v2491 = vmax.f32 %v2427, 0.0
  %v2492 = vmax.f32 %v2428, 0.0
  %v2493 = vmax.f32 %v2429, 0.0
  %v2494 = vmax.f32 %v2430, 0.0
  %v2495 = vmax.f32 %v2431, 0.0
  %v2496 = vmax.f32 %v2432, 0.0
  %v2497 = vmax.f32 %v2433, 0.0
  %v2498 = vld [vmem:[%s5] sm:$0xff]
  %v2499 = vld [vmem:[%s5 + $0x8] sm:$0xff]
  %v2500 = vld [vmem:[%s5 + $0x10] sm:$0xff]
  %v2501 = vld [vmem:[%s5 + $0x18] sm:$0xff]
  %v2502 = vld [vmem:[%s5 + $0x20] sm:$0xff]
  %v2503 = vld [vmem:[%s5 + $0x28] sm:$0xff]
  %v2504 = vld [vmem:[%s5 + $0x30] sm:$0xff]
  %v2505 = vld [vmem:[%s5 + $0x38] sm:$0xff]
  %v2506 = vld [vmem:[%s5 + $0x40] sm:$0xff]
  %v2507 = vld [vmem:[%s5 + $0x48] sm:$0xff]
  %v2508 = vld [vmem:[%s5 + $0x50] sm:$0xff]
  %v2509 = vld [vmem:[%s5 + $0x58] sm:$0xff]
  %v2510 = vld [vmem:[%s5 + $0x60] sm:$0xff]
  %v2511 = vld [vmem:[%s5 + $0x68] sm:$0xff]
  %v2512 = vld [vmem:[%s5 + $0x70] sm:$0xff]
  %v2513 = vld [vmem:[%s5 + $0x78] sm:$0xff]
  %v2514 = vld [vmem:[%s5 + $0x80] sm:$0xff]
  %v2515 = vld [vmem:[%s5 + $0x88] sm:$0xff]
  %v2516 = vld [vmem:[%s5 + $0x90] sm:$0xff]
  %v2517 = vld [vmem:[%s5 + $0x98] sm:$0xff]
  %v2518 = vld [vmem:[%s5 + $0xa0] sm:$0xff]
  %v2519 = vld [vmem:[%s5 + $0xa8] sm:$0xff]
  %v2520 = vld [vmem:[%s5 + $0xb0] sm:$0xff]
  %v2521 = vld [vmem:[%s5 + $0xb8] sm:$0xff]
  %v2522 = vld [vmem:[%s5 + $0xc0] sm:$0xff]
  %v2523 = vld [vmem:[%s5 + $0xc8] sm:$0xff]
  %v2524 = vld [vmem:[%s5 + $0xd0] sm:$0xff]
  %v2525 = vld [vmem:[%s5 + $0xd8] sm:$0xff]
  %v2526 = vld [vmem:[%s5 + $0xe0] sm:$0xff]
  %v2527 = vld [vmem:[%s5 + $0xe8] sm:$0xff]
  %v2528 = vld [vmem:[%s5 + $0xf0] sm:$0xff]
  %v2529 = vld [vmem:[%s5 + $0xf8] sm:$0xff]
  %2531 = vset.pattern.permute.xlu0 0
  %2532 = vperm.xlu0 %2531, %v2498
  %v2533 = vpop.permute.xlu0 %2532
  %2536 = vset.pattern.permute.xlu0 0
  %2537 = vperm.xlu0 %2536, %v2499
  %v2538 = vpop.permute.xlu0 %2537
  %2541 = vset.pattern.permute.xlu0 0
  %2542 = vperm.xlu0 %2541, %v2500
  %v2543 = vpop.permute.xlu0 %2542
  %2546 = vset.pattern.permute.xlu0 0
  %2547 = vperm.xlu0 %2546, %v2501
  %v2548 = vpop.permute.xlu0 %2547
  %2551 = vset.pattern.permute.xlu0 0
  %2552 = vperm.xlu0 %2551, %v2502
  %v2553 = vpop.permute.xlu0 %2552
  %2556 = vset.pattern.permute.xlu0 0
  %2557 = vperm.xlu0 %2556, %v2503
  %v2558 = vpop.permute.xlu0 %2557
  %2561 = vset.pattern.permute.xlu0 0
  %2562 = vperm.xlu0 %2561, %v2504
  %v2563 = vpop.permute.xlu0 %2562
  %2566 = vset.pattern.permute.xlu0 0
  %2567 = vperm.xlu0 %2566, %v2505
  %v2568 = vpop.permute.xlu0 %2567
  %2571 = vset.pattern.permute.xlu0 0
  %2572 = vperm.xlu0 %2571, %v2506
  %v2573 = vpop.permute.xlu0 %2572
  %2576 = vset.pattern.permute.xlu0 0
  %2577 = vperm.xlu0 %2576, %v2507
  %v2578 = vpop.permute.xlu0 %2577
  %2581 = vset.pattern.permute.xlu0 0
  %2582 = vperm.xlu0 %2581, %v2508
  %v2583 = vpop.permute.xlu0 %2582
  %2586 = vset.pattern.permute.xlu0 0
  %2587 = vperm.xlu0 %2586, %v2509
  %v2588 = vpop.permute.xlu0 %2587
  %2591 = vset.pattern.permute.xlu0 0
  %2592 = vperm.xlu0 %2591, %v2510
  %v2593 = vpop.permute.xlu0 %2592
  %2596 = vset.pattern.permute.xlu0 0
  %2597 = vperm.xlu0 %2596, %v2511
  %v2598 = vpop.permute.xlu0 %2597
  %2601 = vset.pattern.permute.xlu0 0
  %2602 = vperm.xlu0 %2601, %v2512
  %v2603 = vpop.permute.xlu0 %2602
  %2606 = vset.pattern.permute.xlu0 0
  %2607 = vperm.xlu0 %2606, %v2513
  %v2608 = vpop.permute.xlu0 %2607
  %2611 = vset.pattern.permute.xlu0 0
  %2612 = vperm.xlu0 %2611, %v2514
  %v2613 = vpop.permute.xlu0 %2612
  %2616 = vset.pattern.permute.xlu0 0
  %2617 = vperm.xlu0 %2616, %v2515
  %v2618 = vpop.permute.xlu0 %2617
  %2621 = vset.pattern.permute.xlu0 0
  %2622 = vperm.xlu0 %2621, %v2516
  %v2623 = vpop.permute.xlu0 %2622
  %2626 = vset.pattern.permute.xlu0 0
  %2627 = vperm.xlu0 %2626, %v2517
  %v2628 = vpop.permute.xlu0 %2627
  %2631 = vset.pattern.permute.xlu0 0
  %2632 = vperm.xlu0 %2631, %v2518
  %v2633 = vpop.permute.xlu0 %2632
  %2636 = vset.pattern.permute.xlu0 0
  %2637 = vperm.xlu0 %2636, %v2519
  %v2638 = vpop.permute.xlu0 %2637
  %2641 = vset.pattern.permute.xlu0 0
  %2642 = vperm.xlu0 %2641, %v2520
  %v2643 = vpop.permute.xlu0 %2642
  %2646 = vset.pattern.permute.xlu0 0
  %2647 = vperm.xlu0 %2646, %v2521
  %v2648 = vpop.permute.xlu0 %2647
  %2651 = vset.pattern.permute.xlu0 0
  %2652 = vperm.xlu0 %2651, %v2522
  %v2653 = vpop.permute.xlu0 %2652
  %2656 = vset.pattern.permute.xlu0 0
  %2657 = vperm.xlu0 %2656, %v2523
  %v2658 = vpop.permute.xlu0 %2657
  %2661 = vset.pattern.permute.xlu0 0
  %2662 = vperm.xlu0 %2661, %v2524
  %v2663 = vpop.permute.xlu0 %2662
  %2666 = vset.pattern.permute.xlu0 0
  %2667 = vperm.xlu0 %2666, %v2525
  %v2668 = vpop.permute.xlu0 %2667
  %2671 = vset.pattern.permute.xlu0 0
  %2672 = vperm.xlu0 %2671, %v2526
  %v2673 = vpop.permute.xlu0 %2672
  %2676 = vset.pattern.permute.xlu0 0
  %2677 = vperm.xlu0 %2676, %v2527
  %v2678 = vpop.permute.xlu0 %2677
  %2681 = vset.pattern.permute.xlu0 0
  %2682 = vperm.xlu0 %2681, %v2528
  %v2683 = vpop.permute.xlu0 %2682
  %2686 = vset.pattern.permute.xlu0 0
  %2687 = vperm.xlu0 %2686, %v2529
  %v2688 = vpop.permute.xlu0 %2687
  %v2690 = vmul.f32 %v2434, %v2533
  %v2691 = vmul.f32 %v2435, %v2533
  %v2692 = vmul.f32 %v2436, %v2538
  %v2693 = vmul.f32 %v2437, %v2538
  %v2694 = vmul.f32 %v2438, %v2543
  %v2695 = vmul.f32 %v2439, %v2543
  %v2696 = vmul.f32 %v2440, %v2548
  %v2697 = vmul.f32 %v2441, %v2548
  %v2698 = vmul.f32 %v2442, %v2553
  %v2699 = vmul.f32 %v2443, %v2553
  %v2700 = vmul.f32 %v2444, %v2558
  %v2701 = vmul.f32 %v2445, %v2558
  %v2702 = vmul.f32 %v2446, %v2563
  %v2703 = vmul.f32 %v2447, %v2563
  %v2704 = vmul.f32 %v2448, %v2568
  %v2705 = vmul.f32 %v2449, %v2568
  %v2706 = vmul.f32 %v2450, %v2573
  %v2707 = vmul.f32 %v2451, %v2573
  %v2708 = vmul.f32 %v2452, %v2578
  %v2709 = vmul.f32 %v2453, %v2578
  %v2710 = vmul.f32 %v2454, %v2583
  %v2711 = vmul.f32 %v2455, %v2583
  %v2712 = vmul.f32 %v2456, %v2588
  %v2713 = vmul.f32 %v2457, %v2588
  %v2714 = vmul.f32 %v2458, %v2593
  %v2715 = vmul.f32 %v2459, %v2593
  %v2716 = vmul.f32 %v2460, %v2598
  %v2717 = vmul.f32 %v2461, %v2598
  %v2718 = vmul.f32 %v2462, %v2603
  %v2719 = vmul.f32 %v2463, %v2603
  %v2720 = vmul.f32 %v2464, %v2608
  %v2721 = vmul.f32 %v2465, %v2608
  %v2722 = vmul.f32 %v2466, %v2613
  %v2723 = vmul.f32 %v2467, %v2613
  %v2724 = vmul.f32 %v2468, %v2618
  %v2725 = vmul.f32 %v2469, %v2618
  %v2726 = vmul.f32 %v2470, %v2623
  %v2727 = vmul.f32 %v2471, %v2623
  %v2728 = vmul.f32 %v2472, %v2628
  %v2729 = vmul.f32 %v2473, %v2628
  %v2730 = vmul.f32 %v2474, %v2633
  %v2731 = vmul.f32 %v2475, %v2633
  %v2732 = vmul.f32 %v2476, %v2638
  %v2733 = vmul.f32 %v2477, %v2638
  %v2734 = vmul.f32 %v2478, %v2643
  %v2735 = vmul.f32 %v2479, %v2643
  %v2736 = vmul.f32 %v2480, %v2648
  %v2737 = vmul.f32 %v2481, %v2648
  %v2738 = vmul.f32 %v2482, %v2653
  %v2739 = vmul.f32 %v2483, %v2653
  %v2740 = vmul.f32 %v2484, %v2658
  %v2741 = vmul.f32 %v2485, %v2658
  %v2742 = vmul.f32 %v2486, %v2663
  %v2743 = vmul.f32 %v2487, %v2663
  %v2744 = vmul.f32 %v2488, %v2668
  %v2745 = vmul.f32 %v2489, %v2668
  %v2746 = vmul.f32 %v2490, %v2673
  %v2747 = vmul.f32 %v2491, %v2673
  %v2748 = vmul.f32 %v2492, %v2678
  %v2749 = vmul.f32 %v2493, %v2678
  %v2750 = vmul.f32 %v2494, %v2683
  %v2751 = vmul.f32 %v2495, %v2683
  %v2752 = vmul.f32 %v2496, %v2688
  %v2753 = vmul.f32 %v2497, %v2688
  %v2754 = vadd.f32 %v2690, %v2692
  %v2755 = vadd.f32 %v2754, %v2694
  %v2756 = vadd.f32 %v2755, %v2696
  %v2757 = vadd.f32 %v2756, %v2698
  %v2758 = vadd.f32 %v2757, %v2700
  %v2759 = vadd.f32 %v2758, %v2702
  %v2760 = vadd.f32 %v2759, %v2704
  %v2761 = vadd.f32 %v2760, %v2706
  %v2762 = vadd.f32 %v2761, %v2708
  %v2763 = vadd.f32 %v2762, %v2710
  %v2764 = vadd.f32 %v2763, %v2712
  %v2765 = vadd.f32 %v2764, %v2714
  %v2766 = vadd.f32 %v2765, %v2716
  %v2767 = vadd.f32 %v2766, %v2718
  %v2768 = vadd.f32 %v2767, %v2720
  %v2769 = vadd.f32 %v2768, %v2722
  %v2770 = vadd.f32 %v2769, %v2724
  %v2771 = vadd.f32 %v2770, %v2726
  %v2772 = vadd.f32 %v2771, %v2728
  %v2773 = vadd.f32 %v2772, %v2730
  %v2774 = vadd.f32 %v2773, %v2732
  %v2775 = vadd.f32 %v2774, %v2734
  %v2776 = vadd.f32 %v2775, %v2736
  %v2777 = vadd.f32 %v2776, %v2738
  %v2778 = vadd.f32 %v2777, %v2740
  %v2779 = vadd.f32 %v2778, %v2742
  %v2780 = vadd.f32 %v2779, %v2744
  %v2781 = vadd.f32 %v2780, %v2746
  %v2782 = vadd.f32 %v2781, %v2748
  %v2783 = vadd.f32 %v2782, %v2750
  %v2784 = vadd.f32 %v2783, %v2752
  %v2785 = vrot.slane %v2784, 4
  %v2786 = vadd.f32 %v2784, %v2785
  %v2787 = vrot.slane %v2786, 2
  %v2788 = vadd.f32 %v2786, %v2787
  %v2789 = vrot.slane %v2788, 1
  %v2790 = vadd.f32 %v2788, %v2789
  %v2791 = vadd.f32 %v2691, %v2693
  %v2792 = vadd.f32 %v2791, %v2695
  %v2793 = vadd.f32 %v2792, %v2697
  %v2794 = vadd.f32 %v2793, %v2699
  %v2795 = vadd.f32 %v2794, %v2701
  %v2796 = vadd.f32 %v2795, %v2703
  %v2797 = vadd.f32 %v2796, %v2705
  %v2798 = vadd.f32 %v2797, %v2707
  %v2799 = vadd.f32 %v2798, %v2709
  %v2800 = vadd.f32 %v2799, %v2711
  %v2801 = vadd.f32 %v2800, %v2713
  %v2802 = vadd.f32 %v2801, %v2715
  %v2803 = vadd.f32 %v2802, %v2717
  %v2804 = vadd.f32 %v2803, %v2719
  %v2805 = vadd.f32 %v2804, %v2721
  %v2806 = vadd.f32 %v2805, %v2723
  %v2807 = vadd.f32 %v2806, %v2725
  %v2808 = vadd.f32 %v2807, %v2727
  %v2809 = vadd.f32 %v2808, %v2729
  %v2810 = vadd.f32 %v2809, %v2731
  %v2811 = vadd.f32 %v2810, %v2733
  %v2812 = vadd.f32 %v2811, %v2735
  %v2813 = vadd.f32 %v2812, %v2737
  %v2814 = vadd.f32 %v2813, %v2739
  %v2815 = vadd.f32 %v2814, %v2741
  %v2816 = vadd.f32 %v2815, %v2743
  %v2817 = vadd.f32 %v2816, %v2745
  %v2818 = vadd.f32 %v2817, %v2747
  %v2819 = vadd.f32 %v2818, %v2749
  %v2820 = vadd.f32 %v2819, %v2751
  %v2821 = vadd.f32 %v2820, %v2753
  %v2822 = vrot.slane %v2821, 4
  %v2823 = vadd.f32 %v2821, %v2822
  %v2824 = vrot.slane %v2823, 2
  %v2825 = vadd.f32 %v2823, %v2824
  %v2826 = vrot.slane %v2825, 1
  %v2827 = vadd.f32 %v2825, %v2826
  %v2828 = vld [vmem:[#allocation2] sm:$0x1]
  %2830 = vset.pattern.permute.xlu0 0
  %2831 = vperm.xlu0 %2830, %v2828
  %v2832 = vpop.permute.xlu0 %2831
  %v2834 = vlaneseq
  %v2835 = vshrl.u32 %v2834, 7
  %v2836 = vsub.s32 0, %v2835
  %v2837 = vrot.slane %v2832, %v2836
  %v2838 = vadd.f32 %v2790, %v2837
  %v2839 = vadd.f32 %v2827, %v2837
  %v2842 = vcombine.low %v2838, %v2839
  %v2844 = vunpack.c.l.s4 1966171168
  %v2845 = vunpack.c.0.s8 %v2844
  %v2846 = vlaneseq
  %v2847 = vshrl.u32 %v2846, 7
  %v2848 = vsub.s32 %v2845, %v2847
  %v2849 = vrot.slane %v2842, %v2848
  %v2851 = vunpack.c.l.s4 1966171168
  %v2852 = vunpack.c.0.s8 %v2851
  %v2853 = vlaneseq
  %v2854 = vshrl.u32 %v2853, 7
  %v2855 = vsub.s32 %v2852, %v2854
  %v2856 = vrot.slane %v2849, %v2855
  %v2858 = vlaneseq
  %vm2859 = vcmp.ge.s32.totalorder %v2858, 0
  %vm2860 = vcmp.lt.s32.totalorder %v2858, 256
  %vm2861 = vmand %vm2859, %vm2860
  %2862 = vst.msk [vmem:[%s7] sm:$0x3] %vm2861, %v2856
  // Predicated region
  $region30: #{reward_model_forward.1} parent=0 // pred_check
    _
  $region31: #{reward_model_forward.1} parent=0 // pred_check_branch
    %2864 = sbr.rel (0) target = $region33
  $region32: #{reward_model_forward.1} parent=0 // pred_region
    _
  $region33: #{reward_model_forward.1} parent=0 // pred_fallthru
    _
  // Predicated region
  $region34: #{reward_model_forward.1} parent=0 // pred_check
    _
  $region35: #{reward_model_forward.1} parent=0 // pred_check_branch
    %2866 = sbr.rel (0) target = $region37
  $region36: #{reward_model_forward.1} parent=0 // pred_region
    _
  $region37: #{reward_model_forward.1} parent=0 // pred_fallthru
    _

</llo_original>
